<compile_context>
chip_gen: v7x
topology: tpu7x:2x2x1
jax: 0.10.0
libtpu: 0.0.40
codegen_flags: <defaults>
</compile_context>

<pallas_src>
import math

import jax
import jax.numpy as jnp
from jax.experimental import pallas as pl
from jax.experimental.pallas import tpu as pltpu

# ----------------------------- small synthetic config -----------------------------
B = 2            # batch
S = 8            # sequence length
H = 32           # hidden_size == input_dims == output_dims
TT = 16          # hidden_t_dim (timestep-embedding dim)
TE = TT * 4      # time_embed_dim
L = 2            # num_transformer_layers
NH = 2           # num_transformer_heads
DH = H // NH     # head dim
INTER = 4 * H    # BERT intermediate size
LN_EPS = 1e-12   # BERT layer_norm_eps
BS = B * S       # flattened token count


# ----------------------------- shared math helpers -----------------------------
def _layer_norm_fast(x, g, b, eps):
    # E[x^2] - mu^2 form: the two reductions are independent -> XLU pushes can overlap.
    n = x.shape[-1]
    inv_n = 1.0 / n
    mu = jnp.sum(x, axis=-1, keepdims=True) * inv_n
    ex2 = jnp.sum(x * x, axis=-1, keepdims=True) * inv_n
    var = jnp.maximum(ex2 - mu * mu, 0.0)
    return (x - mu) * jax.lax.rsqrt(var + eps) * g + b


def _layer_norm_ref(x, g, b, eps):
    mu = jnp.mean(x, axis=-1, keepdims=True)
    var = jnp.mean((x - mu) ** 2, axis=-1, keepdims=True)
    return (x - mu) * jax.lax.rsqrt(var + eps) * g + b


def _gelu(x):
    # TODO(synk): HF BERT default "gelu" is erf-based; erf is not guaranteed to lower in
    # Mosaic, so the tanh approximation is used (max abs error ~1e-3 in activations).
    c = math.sqrt(2.0 / math.pi)
    return 0.5 * x * (1.0 + jnp.tanh(c * (x + 0.044715 * x * x * x)))


def timestep_embedding(ts, dim, max_period=10000.0):
    half = dim // 2
    freqs = jnp.exp(-math.log(max_period) * jnp.arange(half, dtype=jnp.float32) / half)
    args = ts.astype(jnp.float32)[:, None] * freqs[None, :]
    emb = jnp.concatenate([jnp.cos(args), jnp.sin(args)], axis=-1)
    if dim % 2:
        emb = jnp.concatenate([emb, jnp.zeros_like(emb[:, :1])], axis=-1)
    return emb


# ----------------------------- Pallas kernel -----------------------------
# wqkvo_ref: (L, 4, H, H) bf16  -> [Wq*scale, Wk, Wv, Wo]
# vec_ref:   (L, 9, H)  f32     -> [bq*scale, bk, bv, bo, ln1g, ln1b, b2, ln2g, ln2b]
# bias_ref:  (NH*BS, NH*BS) f32 -> head+batch block-diagonal score bias
# hm_ref:    (NH, H) f32        -> per-head lane masks
def scandl_kernel(h0_ref, bias_ref, ln0_ref, hm_ref,
                  wqkvo_ref, w1_ref, b1_ref, w2_ref, vec_ref,
                  out_ref):
    f32 = jnp.float32
    bf16 = jnp.bfloat16

    # ---- emb_inputs = LayerNorm(x + pos_enc + emb_t); dropout(p=0) = identity ----
    ln0 = ln0_ref[...]                                                    # (2, H)
    h = _layer_norm_fast(h0_ref[...], ln0[0:1, :], ln0[1:2, :], LN_EPS)   # (BS, H) f32

    bias = bias_ref[...]                                                  # (NH*BS, NH*BS)
    hm = hm_ref[...]                                                      # (NH, H)

    for l in range(L):                                                    # static unroll, L=2
        vec = vec_ref[l]                                                  # (9, H)
        hb = h.astype(bf16)

        # ---- Q/K/V projections: full-H outputs, no per-head lane slicing ----
        q = jnp.dot(hb, wqkvo_ref[l, 0], preferred_element_type=f32) + vec[0:1, :]
        k = jnp.dot(hb, wqkvo_ref[l, 1], preferred_element_type=f32) + vec[1:2, :]
        v = jnp.dot(hb, wqkvo_ref[l, 2], preferred_element_type=f32) + vec[2:3, :]

        # ---- stack heads along the sublane axis (vreg-aligned, BS % 8 == 0) ----
        # K/V get their head's lanes kept (others zeroed); Q stays unmasked because
        # the zeroed K lanes already confine the same-head contraction to that head,
        # and cross-head / cross-batch blocks are killed by the -1e9 bias.
        qs = jnp.concatenate([q] * NH, axis=0)                            # (NH*BS, H)
        ks = jnp.concatenate([k * hm[n:n + 1, :] for n in range(NH)], axis=0)
        vs = jnp.concatenate([v * hm[n:n + 1, :] for n in range(NH)], axis=0)

        # ---- ONE score matmul, ONE softmax, ONE pr@V for all heads & batches ----
        sc = jax.lax.dot_general(qs, ks, (((1,), (1,)), ((), ())),
                                 preferred_element_type=f32) + bias       # (NH*BS, NH*BS)
        mx = jnp.max(sc, axis=-1, keepdims=True)
        e = jnp.exp(sc - mx)
        pr = e * pl.reciprocal(jnp.sum(e, axis=-1, keepdims=True), approx=True)
        ctx_s = jnp.dot(pr, vs, preferred_element_type=f32)               # (NH*BS, H)

        # heads live in disjoint lane blocks -> recombining is a vreg-aligned add
        ctx = ctx_s[0:BS, :]
        for n in range(1, NH):
            ctx = ctx + ctx_s[n * BS:(n + 1) * BS, :]                     # (BS, H)

        # ---- BertSelfOutput: single ctx @ Wo + residual + LayerNorm ----
        attn = jnp.dot(ctx.astype(bf16), wqkvo_ref[l, 3],
                       preferred_element_type=f32) + vec[3:4, :]
        h = _layer_norm_fast(h + attn, vec[4:5, :], vec[5:6, :], LN_EPS)

        # ---- BertIntermediate / BertOutput ----
        inter = _gelu(jnp.dot(h.astype(bf16), w1_ref[l],
                              preferred_element_type=f32) + b1_ref[l])
        ffn = jnp.dot(inter.astype(bf16), w2_ref[l],
                      preferred_element_type=f32) + vec[6:7, :]
        h = _layer_norm_fast(h + ffn, vec[7:8, :], vec[8:9, :], LN_EPS)

    out_ref[...] = h.astype(out_ref.dtype)


# ----------------------------- wrapper -----------------------------
def _full_spec(shape):
    zeros = (0,) * len(shape)
    return pl.BlockSpec(tuple(shape), lambda i, _z=zeros: _z)


_PARAM_ORDER = ['wt1', 'bt1', 'wt2', 'bt2', 'ln0g', 'ln0b',
                'wq', 'bq', 'wk', 'bk', 'wv', 'bv', 'wo', 'bo', 'ln1g', 'ln1b',
                'w1', 'b1', 'w2', 'b2', 'ln2g', 'ln2b']

_PARAM_SHAPES = {
    'wt1': (TT, TE), 'bt1': (1, TE), 'wt2': (TE, H), 'bt2': (1, H),
    'ln0g': (1, H), 'ln0b': (1, H),
    'wq': (L, H, H), 'bq': (L, 1, H), 'wk': (L, H, H), 'bk': (L, 1, H),
    'wv': (L, H, H), 'bv': (L, 1, H), 'wo': (L, H, H), 'bo': (L, 1, H),
    'ln1g': (L, 1, H), 'ln1b': (L, 1, H),
    'w1': (L, H, INTER), 'b1': (L, 1, INTER), 'w2': (L, INTER, H), 'b2': (L, 1, H),
    'ln2g': (L, 1, H), 'ln2b': (L, 1, H),
}


def transformer_net_forward(x, ts, pos_enc, attention_mask, p):
    f32 = jnp.float32
    bf16 = jnp.bfloat16

    # ---- hoisted to plain XLA: time-MLP + input sum (tiny, latency-bound) ----
    temb = timestep_embedding(ts, TT)                                    # (B, TT)
    t1 = temb @ p['wt1'] + p['bt1']
    t1 = t1 * jax.nn.sigmoid(t1)                                         # SiLU
    emb_t = t1 @ p['wt2'] + p['bt2']                                     # (B, H)
    h0 = (x + pos_enc + emb_t[:, None, :]).reshape(BS, H).astype(f32)    # (BS, H)

    # ---- head+batch block-diagonal attention bias over the stacked (NH*BS) axis ----
    # Within a (head, batch) block: raw 0/1 mask added to scores (exactly what the module does
    # by passing attention_mask[:, None, None, :] straight into BertEncoder).  Across batches
    # and across heads: -1e9, so exp underflows to exactly 0 -> per-head, per-batch softmax.
    key_mask = attention_mask.astype(f32).reshape(BS)
    batch_ids = jnp.repeat(jnp.arange(B), S)
    same_batch = batch_ids[:, None] == batch_ids[None, :]
    within = jnp.where(same_batch, key_mask[None, :], jnp.float32(-1e9))  # (BS, BS)
    head_ids = jnp.repeat(jnp.arange(NH), BS)
    same_head = head_ids[:, None] == head_ids[None, :]
    bias_s = jnp.where(same_head, jnp.tile(within, (NH, NH)),
                       jnp.float32(-1e9))                                 # (NH*BS, NH*BS)

    # ---- per-head lane masks (head n owns lanes [n*DH, (n+1)*DH)) ----
    hm = (jnp.arange(H)[None, :] // DH == jnp.arange(NH)[:, None]).astype(f32)   # (NH, H)

    # ---- parameter packing (XLA, free); 1/sqrt(DH) folded into Q; weights to bf16 ----
    scale = 1.0 / math.sqrt(DH)
    wqkvo = jnp.stack([p['wq'] * scale, p['wk'], p['wv'], p['wo']],
                      axis=1).astype(bf16)                                # (L, 4, H, H)
    w1 = p['w1'].astype(bf16)                                             # (L, H, INTER)
    w2 = p['w2'].astype(bf16)                                             # (L, INTER, H)
    b1 = p['b1']                                                          # (L, 1, INTER)
    vec = jnp.concatenate([p['bq'] * scale, p['bk'], p['bv'], p['bo'],
                           p['ln1g'], p['ln1b'], p['b2'], p['ln2g'], p['ln2b']],
                          axis=1)                                         # (L, 9, H)
    ln0 = jnp.concatenate([p['ln0g'], p['ln0b']], axis=0)                 # (2, H)

    operands = (h0, bias_s, ln0, hm, wqkvo, w1, b1, w2, vec)

    out = pl.pallas_call(
        scandl_kernel,
        out_shape=jax.ShapeDtypeStruct((BS, H), x.dtype),
        grid_spec=pl.GridSpec(
            grid=(1,),                                    # single invocation; whole batch fused
            in_specs=[_full_spec(op.shape) for op in operands],
            out_specs=pl.BlockSpec((BS, H), lambda i: (0, 0)),
        ),
        compiler_params=pltpu.CompilerParams(dimension_semantics=("parallel",)),
    )(*operands)
    return out.reshape(B, S, H)


# ----------------------------- pure-JAX reference -----------------------------
def reference_forward(x, ts, pos_enc, attention_mask, p):
    temb = timestep_embedding(ts, TT)                       # (B, TT)
    t1 = temb @ p['wt1'] + p['bt1']
    t1 = t1 * jax.nn.sigmoid(t1)
    emb_t = t1 @ p['wt2'] + p['bt2']                        # (B, H)
    h = x + pos_enc + emb_t[:, None, :]
    h = _layer_norm_ref(h, p['ln0g'], p['ln0b'], LN_EPS)
    mask = attention_mask.astype(jnp.float32)[:, None, None, :]
    for l in range(L):
        q = (h @ p['wq'][l] + p['bq'][l]).reshape(B, S, NH, DH).transpose(0, 2, 1, 3)
        k = (h @ p['wk'][l] + p['bk'][l]).reshape(B, S, NH, DH).transpose(0, 2, 1, 3)
        v = (h @ p['wv'][l] + p['bv'][l]).reshape(B, S, NH, DH).transpose(0, 2, 1, 3)
        sc = q @ k.transpose(0, 1, 3, 2) / math.sqrt(DH) + mask
        pr = jax.nn.softmax(sc, axis=-1)
        ctx = (pr @ v).transpose(0, 2, 1, 3).reshape(B, S, H)
        attn = ctx @ p['wo'][l] + p['bo'][l]
        h = _layer_norm_ref(h + attn, p['ln1g'][l], p['ln1b'][l], LN_EPS)
        inter = _gelu(h @ p['w1'][l] + p['b1'][l])
        ffn = inter @ p['w2'][l] + p['b2'][l]
        h = _layer_norm_ref(h + ffn, p['ln2g'][l], p['ln2b'][l], LN_EPS)
    return h.astype(x.dtype)


# ----------------------------- main -----------------------------
def _init_params(key):
    params = {}
    keys = jax.random.split(key, len(_PARAM_ORDER))
    for k, name in zip(keys, _PARAM_ORDER):
        shape = _PARAM_SHAPES[name]
        if name.startswith('ln') and name.endswith('g'):
            params[name] = jnp.ones(shape, jnp.float32)
        elif name.startswith('ln') and name.endswith('b'):
            params[name] = jnp.zeros(shape, jnp.float32)
        else:
            params[name] = (0.02 * jax.random.normal(k, shape)).astype(jnp.float32)
    return params


if __name__ == "__main__":
    root = jax.random.PRNGKey(0)
    k_param, k_x, k_pos = jax.random.split(root, 3)

    params = _init_params(k_param)

    x = jax.random.normal(k_x, (B, S, H), dtype=jnp.float32)          # noised input embeddings
    pos_enc = jax.random.normal(k_pos, (B, S, H), dtype=jnp.float32)  # positional embeddings
    ts = jnp.array([3, 7], dtype=jnp.int32)                           # timesteps
    attention_mask = jnp.ones((B, S), dtype=jnp.float32)
    attention_mask = attention_mask.at[1, -2:].set(0.0)               # some padding in batch 1

    fwd = jax.jit(transformer_net_forward)
    out = jax.block_until_ready(fwd(x, ts, pos_enc, attention_mask, params))

    ref = reference_forward(x, ts, pos_enc, attention_mask, params)
    assert out.shape == (B, S, H) and out.dtype == x.dtype
    assert jnp.allclose(out, ref, atol=1e-2, rtol=1e-2), \
        f"max abs diff {jnp.max(jnp.abs(out - ref))}"

    print("KERNEL_OK")
</pallas_src>

<mosaic_0001>
module attributes {stable_mosaic.version = 11 : i64} {
  func.func @scandl_kernel(%arg0: i32, %arg1: memref<16x32xf32, #tpu.memory_space<vmem>>, %arg2: memref<32x32xf32, #tpu.memory_space<vmem>>, %arg3: memref<2x32xf32, #tpu.memory_space<vmem>>, %arg4: memref<2x32xf32, #tpu.memory_space<vmem>>, %arg5: memref<2x4x32x32xbf16, #tpu.memory_space<vmem>>, %arg6: memref<2x32x128xbf16, #tpu.memory_space<vmem>>, %arg7: memref<2x1x128xf32, #tpu.memory_space<vmem>>, %arg8: memref<2x128x32xbf16, #tpu.memory_space<vmem>>, %arg9: memref<2x9x32xf32, #tpu.memory_space<vmem>>, %arg10: memref<16x32xf32, #tpu.memory_space<vmem>>) attributes {dimension_semantics = [#tpu.dimension_semantics<parallel>], iteration_bounds = array<i64: 1>, scalar_prefetch = 0 : i64, scratch_operands = 0 : i64, tpu.core_type = #tpu.core_type<tc>, window_params = [{pipeline_mode = #tpu.pipeline_mode<synchronous>, transform_indices = @transform_0, window_bounds = array<i64: 16, 32>}, {pipeline_mode = #tpu.pipeline_mode<synchronous>, transform_indices = @transform_1, window_bounds = array<i64: 32, 32>}, {pipeline_mode = #tpu.pipeline_mode<synchronous>, transform_indices = @transform_2, window_bounds = array<i64: 2, 32>}, {pipeline_mode = #tpu.pipeline_mode<synchronous>, transform_indices = @transform_3, window_bounds = array<i64: 2, 32>}, {pipeline_mode = #tpu.pipeline_mode<synchronous>, transform_indices = @transform_4, window_bounds = array<i64: 2, 4, 32, 32>}, {pipeline_mode = #tpu.pipeline_mode<synchronous>, transform_indices = @transform_5, window_bounds = array<i64: 2, 32, 128>}, {pipeline_mode = #tpu.pipeline_mode<synchronous>, transform_indices = @transform_6, window_bounds = array<i64: 2, 1, 128>}, {pipeline_mode = #tpu.pipeline_mode<synchronous>, transform_indices = @transform_7, window_bounds = array<i64: 2, 128, 32>}, {pipeline_mode = #tpu.pipeline_mode<synchronous>, transform_indices = @transform_8, window_bounds = array<i64: 2, 9, 32>}, {pipeline_mode = #tpu.pipeline_mode<synchronous>, transform_indices = @transform_9, window_bounds = array<i64: 16, 32>}]} {
    %c0 = arith.constant 0 : index
    %c0_0 = arith.constant 0 : index
    %0 = vector.load %arg3[%c0, %c0_0] : memref<2x32xf32, #tpu.memory_space<vmem>>, vector<2x32xf32>
    %c0_1 = arith.constant 0 : index
    %c0_2 = arith.constant 0 : index
    %1 = vector.load %arg1[%c0_1, %c0_2] : memref<16x32xf32, #tpu.memory_space<vmem>>, vector<16x32xf32>
    %2 = vector.extract_strided_slice %0 {offsets = [0, 0], sizes = [1, 32], strides = [1, 1]} : vector<2x32xf32> to vector<1x32xf32>
    %3 = vector.extract_strided_slice %0 {offsets = [1, 0], sizes = [1, 32], strides = [1, 1]} : vector<2x32xf32> to vector<1x32xf32>
    %cst = arith.constant dense<0.000000e+00> : vector<16xf32>
    %4 = vector.multi_reduction <add>, %1, %cst [1] : vector<16x32xf32> to vector<16xf32>
    %5 = vector.shape_cast %4 : vector<16xf32> to vector<16x1xf32>
    %cst_3 = arith.constant 3.125000e-02 : f32
    %6 = vector.broadcast %cst_3 : f32 to vector<16x1xf32>
    %7 = arith.mulf %5, %6 : vector<16x1xf32>
    %8 = arith.mulf %1, %1 : vector<16x32xf32>
    %cst_4 = arith.constant dense<0.000000e+00> : vector<16xf32>
    %9 = vector.multi_reduction <add>, %8, %cst_4 [1] : vector<16x32xf32> to vector<16xf32>
    %10 = vector.shape_cast %9 : vector<16xf32> to vector<16x1xf32>
    %cst_5 = arith.constant 3.125000e-02 : f32
    %11 = vector.broadcast %cst_5 : f32 to vector<16x1xf32>
    %12 = arith.mulf %10, %11 : vector<16x1xf32>
    %13 = arith.mulf %7, %7 : vector<16x1xf32>
    %14 = arith.subf %12, %13 : vector<16x1xf32>
    %cst_6 = arith.constant 0.000000e+00 : f32
    %15 = vector.broadcast %cst_6 : f32 to vector<16x1xf32>
    %16 = arith.maximumf %14, %15 : vector<16x1xf32>
    %17 = vector.broadcast %7 : vector<16x1xf32> to vector<16x32xf32>
    %18 = arith.subf %1, %17 : vector<16x32xf32>
    %cst_7 = arith.constant 9.99999996E-13 : f32
    %19 = vector.broadcast %cst_7 : f32 to vector<16x1xf32>
    %20 = arith.addf %16, %19 : vector<16x1xf32>
    %21 = math.rsqrt %20 : vector<16x1xf32>
    %22 = vector.broadcast %21 : vector<16x1xf32> to vector<16x32xf32>
    %23 = arith.mulf %18, %22 : vector<16x32xf32>
    %24 = vector.broadcast %2 : vector<1x32xf32> to vector<16x32xf32>
    %25 = arith.mulf %23, %24 : vector<16x32xf32>
    %26 = vector.broadcast %3 : vector<1x32xf32> to vector<16x32xf32>
    %27 = arith.addf %25, %26 : vector<16x32xf32>
    %c0_8 = arith.constant 0 : index
    %c0_9 = arith.constant 0 : index
    %28 = vector.load %arg2[%c0_8, %c0_9] : memref<32x32xf32, #tpu.memory_space<vmem>>, vector<32x32xf32>
    %c0_10 = arith.constant 0 : index
    %c0_11 = arith.constant 0 : index
    %29 = vector.load %arg4[%c0_10, %c0_11] : memref<2x32xf32, #tpu.memory_space<vmem>>, vector<2x32xf32>
    %c0_12 = arith.constant 0 : index
    %c0_13 = arith.constant 0 : index
    %c0_14 = arith.constant 0 : index
    %30 = vector.load %arg9[%c0_12, %c0_13, %c0_14] : memref<2x9x32xf32, #tpu.memory_space<vmem>>, vector<1x9x32xf32>
    %31 = vector.shape_cast %30 : vector<1x9x32xf32> to vector<9x32xf32>
    %32 = arith.truncf %27 : vector<16x32xf32> to vector<16x32xbf16>
    %c0_15 = arith.constant 0 : index
    %c0_16 = arith.constant 0 : index
    %c0_17 = arith.constant 0 : index
    %c0_18 = arith.constant 0 : index
    %33 = vector.load %arg5[%c0_15, %c0_16, %c0_17, %c0_18] : memref<2x4x32x32xbf16, #tpu.memory_space<vmem>>, vector<1x1x32x32xbf16>
    %34 = vector.shape_cast %33 : vector<1x1x32x32xbf16> to vector<32x32xbf16>
    %cst_19 = arith.constant dense<0.000000e+00> : vector<16x32xf32>
    %35 = tpu.matmul %32, %34, %cst_19 {dimension_numbers = #tpu.dot_dimension_numbers<[1], [0], [0], [1], [0, 0, 1, 1], [], []>} : vector<16x32xbf16>, vector<32x32xbf16>, vector<16x32xf32> -> vector<16x32xf32>
    %36 = vector.extract_strided_slice %31 {offsets = [0, 0], sizes = [1, 32], strides = [1, 1]} : vector<9x32xf32> to vector<1x32xf32>
    %37 = vector.broadcast %36 : vector<1x32xf32> to vector<16x32xf32>
    %38 = arith.addf %35, %37 : vector<16x32xf32>
    %c0_20 = arith.constant 0 : index
    %c1 = arith.constant 1 : index
    %c0_21 = arith.constant 0 : index
    %c0_22 = arith.constant 0 : index
    %39 = vector.load %arg5[%c0_20, %c1, %c0_21, %c0_22] : memref<2x4x32x32xbf16, #tpu.memory_space<vmem>>, vector<1x1x32x32xbf16>
    %40 = vector.shape_cast %39 : vector<1x1x32x32xbf16> to vector<32x32xbf16>
    %cst_23 = arith.constant dense<0.000000e+00> : vector<16x32xf32>
    %41 = tpu.matmul %32, %40, %cst_23 {dimension_numbers = #tpu.dot_dimension_numbers<[1], [0], [0], [1], [0, 0, 1, 1], [], []>} : vector<16x32xbf16>, vector<32x32xbf16>, vector<16x32xf32> -> vector<16x32xf32>
    %42 = vector.extract_strided_slice %31 {offsets = [1, 0], sizes = [1, 32], strides = [1, 1]} : vector<9x32xf32> to vector<1x32xf32>
    %43 = vector.broadcast %42 : vector<1x32xf32> to vector<16x32xf32>
    %44 = arith.addf %41, %43 : vector<16x32xf32>
    %c0_24 = arith.constant 0 : index
    %c2 = arith.constant 2 : index
    %c0_25 = arith.constant 0 : index
    %c0_26 = arith.constant 0 : index
    %45 = vector.load %arg5[%c0_24, %c2, %c0_25, %c0_26] : memref<2x4x32x32xbf16, #tpu.memory_space<vmem>>, vector<1x1x32x32xbf16>
    %46 = vector.shape_cast %45 : vector<1x1x32x32xbf16> to vector<32x32xbf16>
    %cst_27 = arith.constant dense<0.000000e+00> : vector<16x32xf32>
    %47 = tpu.matmul %32, %46, %cst_27 {dimension_numbers = #tpu.dot_dimension_numbers<[1], [0], [0], [1], [0, 0, 1, 1], [], []>} : vector<16x32xbf16>, vector<32x32xbf16>, vector<16x32xf32> -> vector<16x32xf32>
    %48 = vector.extract_strided_slice %31 {offsets = [2, 0], sizes = [1, 32], strides = [1, 1]} : vector<9x32xf32> to vector<1x32xf32>
    %49 = vector.broadcast %48 : vector<1x32xf32> to vector<16x32xf32>
    %50 = arith.addf %47, %49 : vector<16x32xf32>
    %51 = tpu.concatenate %38, %38 in 0 : vector<16x32xf32>, vector<16x32xf32> -> vector<32x32xf32>
    %52 = vector.extract_strided_slice %29 {offsets = [0, 0], sizes = [1, 32], strides = [1, 1]} : vector<2x32xf32> to vector<1x32xf32>
    %53 = vector.broadcast %52 : vector<1x32xf32> to vector<16x32xf32>
    %54 = arith.mulf %44, %53 : vector<16x32xf32>
    %55 = vector.extract_strided_slice %29 {offsets = [1, 0], sizes = [1, 32], strides = [1, 1]} : vector<2x32xf32> to vector<1x32xf32>
    %56 = vector.broadcast %55 : vector<1x32xf32> to vector<16x32xf32>
    %57 = arith.mulf %44, %56 : vector<16x32xf32>
    %58 = tpu.concatenate %54, %57 in 0 : vector<16x32xf32>, vector<16x32xf32> -> vector<32x32xf32>
    %59 = vector.extract_strided_slice %29 {offsets = [0, 0], sizes = [1, 32], strides = [1, 1]} : vector<2x32xf32> to vector<1x32xf32>
    %60 = vector.broadcast %59 : vector<1x32xf32> to vector<16x32xf32>
    %61 = arith.mulf %50, %60 : vector<16x32xf32>
    %62 = vector.extract_strided_slice %29 {offsets = [1, 0], sizes = [1, 32], strides = [1, 1]} : vector<2x32xf32> to vector<1x32xf32>
    %63 = vector.broadcast %62 : vector<1x32xf32> to vector<16x32xf32>
    %64 = arith.mulf %50, %63 : vector<16x32xf32>
    %65 = tpu.concatenate %61, %64 in 0 : vector<16x32xf32>, vector<16x32xf32> -> vector<32x32xf32>
    %cst_28 = arith.constant dense<0.000000e+00> : vector<32x32xf32>
    %66 = tpu.matmul %51, %58, %cst_28 {dimension_numbers = #tpu.dot_dimension_numbers<[1], [1], [0], [0], [0, 0, 1, 0], [], []>} : vector<32x32xf32>, vector<32x32xf32>, vector<32x32xf32> -> vector<32x32xf32>
    %67 = arith.addf %66, %28 : vector<32x32xf32>
    %cst_29 = arith.constant dense<0xFF800000> : vector<32xf32>
    %68 = vector.multi_reduction <maximumf>, %67, %cst_29 [1] : vector<32x32xf32> to vector<32xf32>
    %69 = vector.shape_cast %68 : vector<32xf32> to vector<32x1xf32>
    %70 = vector.broadcast %69 : vector<32x1xf32> to vector<32x32xf32>
    %71 = arith.subf %67, %70 : vector<32x32xf32>
    %72 = math.exp %71 : vector<32x32xf32>
    %cst_30 = arith.constant dense<0.000000e+00> : vector<32xf32>
    %73 = vector.multi_reduction <add>, %72, %cst_30 [1] : vector<32x32xf32> to vector<32xf32>
    %74 = vector.shape_cast %73 : vector<32xf32> to vector<32x1xf32>
    %75 = tpu.reciprocal %74 {approx = true} : vector<32x1xf32> -> vector<32x1xf32>
    %76 = vector.broadcast %75 : vector<32x1xf32> to vector<32x32xf32>
    %77 = arith.mulf %72, %76 : vector<32x32xf32>
    %cst_31 = arith.constant dense<0.000000e+00> : vector<32x32xf32>
    %78 = tpu.matmul %77, %65, %cst_31 {dimension_numbers = #tpu.dot_dimension_numbers<[1], [0], [0], [1], [0, 0, 1, 1], [], []>} : vector<32x32xf32>, vector<32x32xf32>, vector<32x32xf32> -> vector<32x32xf32>
    %79 = vector.extract_strided_slice %78 {offsets = [0, 0], sizes = [16, 32], strides = [1, 1]} : vector<32x32xf32> to vector<16x32xf32>
    %80 = vector.extract_strided_slice %78 {offsets = [16, 0], sizes = [16, 32], strides = [1, 1]} : vector<32x32xf32> to vector<16x32xf32>
    %81 = arith.addf %79, %80 : vector<16x32xf32>
    %82 = arith.truncf %81 : vector<16x32xf32> to vector<16x32xbf16>
    %c0_32 = arith.constant 0 : index
    %c3 = arith.constant 3 : index
    %c0_33 = arith.constant 0 : index
    %c0_34 = arith.constant 0 : index
    %83 = vector.load %arg5[%c0_32, %c3, %c0_33, %c0_34] : memref<2x4x32x32xbf16, #tpu.memory_space<vmem>>, vector<1x1x32x32xbf16>
    %84 = vector.shape_cast %83 : vector<1x1x32x32xbf16> to vector<32x32xbf16>
    %cst_35 = arith.constant dense<0.000000e+00> : vector<16x32xf32>
    %85 = tpu.matmul %82, %84, %cst_35 {dimension_numbers = #tpu.dot_dimension_numbers<[1], [0], [0], [1], [0, 0, 1, 1], [], []>} : vector<16x32xbf16>, vector<32x32xbf16>, vector<16x32xf32> -> vector<16x32xf32>
    %86 = vector.extract_strided_slice %31 {offsets = [3, 0], sizes = [1, 32], strides = [1, 1]} : vector<9x32xf32> to vector<1x32xf32>
    %87 = vector.broadcast %86 : vector<1x32xf32> to vector<16x32xf32>
    %88 = arith.addf %85, %87 : vector<16x32xf32>
    %89 = arith.addf %27, %88 : vector<16x32xf32>
    %90 = vector.extract_strided_slice %31 {offsets = [4, 0], sizes = [1, 32], strides = [1, 1]} : vector<9x32xf32> to vector<1x32xf32>
    %91 = vector.extract_strided_slice %31 {offsets = [5, 0], sizes = [1, 32], strides = [1, 1]} : vector<9x32xf32> to vector<1x32xf32>
    %cst_36 = arith.constant dense<0.000000e+00> : vector<16xf32>
    %92 = vector.multi_reduction <add>, %89, %cst_36 [1] : vector<16x32xf32> to vector<16xf32>
    %93 = vector.shape_cast %92 : vector<16xf32> to vector<16x1xf32>
    %cst_37 = arith.constant 3.125000e-02 : f32
    %94 = vector.broadcast %cst_37 : f32 to vector<16x1xf32>
    %95 = arith.mulf %93, %94 : vector<16x1xf32>
    %96 = arith.mulf %89, %89 : vector<16x32xf32>
    %cst_38 = arith.constant dense<0.000000e+00> : vector<16xf32>
    %97 = vector.multi_reduction <add>, %96, %cst_38 [1] : vector<16x32xf32> to vector<16xf32>
    %98 = vector.shape_cast %97 : vector<16xf32> to vector<16x1xf32>
    %cst_39 = arith.constant 3.125000e-02 : f32
    %99 = vector.broadcast %cst_39 : f32 to vector<16x1xf32>
    %100 = arith.mulf %98, %99 : vector<16x1xf32>
    %101 = arith.mulf %95, %95 : vector<16x1xf32>
    %102 = arith.subf %100, %101 : vector<16x1xf32>
    %cst_40 = arith.constant 0.000000e+00 : f32
    %103 = vector.broadcast %cst_40 : f32 to vector<16x1xf32>
    %104 = arith.maximumf %102, %103 : vector<16x1xf32>
    %105 = vector.broadcast %95 : vector<16x1xf32> to vector<16x32xf32>
    %106 = arith.subf %89, %105 : vector<16x32xf32>
    %cst_41 = arith.constant 9.99999996E-13 : f32
    %107 = vector.broadcast %cst_41 : f32 to vector<16x1xf32>
    %108 = arith.addf %104, %107 : vector<16x1xf32>
    %109 = math.rsqrt %108 : vector<16x1xf32>
    %110 = vector.broadcast %109 : vector<16x1xf32> to vector<16x32xf32>
    %111 = arith.mulf %106, %110 : vector<16x32xf32>
    %112 = vector.broadcast %90 : vector<1x32xf32> to vector<16x32xf32>
    %113 = arith.mulf %111, %112 : vector<16x32xf32>
    %114 = vector.broadcast %91 : vector<1x32xf32> to vector<16x32xf32>
    %115 = arith.addf %113, %114 : vector<16x32xf32>
    %116 = arith.truncf %115 : vector<16x32xf32> to vector<16x32xbf16>
    %c0_42 = arith.constant 0 : index
    %c0_43 = arith.constant 0 : index
    %c0_44 = arith.constant 0 : index
    %117 = vector.load %arg6[%c0_42, %c0_43, %c0_44] : memref<2x32x128xbf16, #tpu.memory_space<vmem>>, vector<1x32x128xbf16>
    %118 = vector.shape_cast %117 : vector<1x32x128xbf16> to vector<32x128xbf16>
    %cst_45 = arith.constant dense<0.000000e+00> : vector<16x128xf32>
    %119 = tpu.matmul %116, %118, %cst_45 {dimension_numbers = #tpu.dot_dimension_numbers<[1], [0], [0], [1], [0, 0, 1, 1], [], []>} : vector<16x32xbf16>, vector<32x128xbf16>, vector<16x128xf32> -> vector<16x128xf32>
    %c0_46 = arith.constant 0 : index
    %c0_47 = arith.constant 0 : index
    %c0_48 = arith.constant 0 : index
    %120 = vector.load %arg7[%c0_46, %c0_47, %c0_48] : memref<2x1x128xf32, #tpu.memory_space<vmem>>, vector<1x1x128xf32>
    %121 = vector.shape_cast %120 : vector<1x1x128xf32> to vector<1x128xf32>
    %122 = vector.broadcast %121 : vector<1x128xf32> to vector<16x128xf32>
    %123 = arith.addf %119, %122 : vector<16x128xf32>
    %cst_49 = arith.constant 5.000000e-01 : f32
    %124 = vector.broadcast %cst_49 : f32 to vector<16x128xf32>
    %125 = arith.mulf %124, %123 : vector<16x128xf32>
    %cst_50 = arith.constant 4.471500e-02 : f32
    %126 = vector.broadcast %cst_50 : f32 to vector<16x128xf32>
    %127 = arith.mulf %126, %123 : vector<16x128xf32>
    %128 = arith.mulf %127, %123 : vector<16x128xf32>
    %129 = arith.mulf %128, %123 : vector<16x128xf32>
    %130 = arith.addf %123, %129 : vector<16x128xf32>
    %cst_51 = arith.constant 0.797884583 : f32
    %131 = vector.broadcast %cst_51 : f32 to vector<16x128xf32>
    %132 = arith.mulf %131, %130 : vector<16x128xf32>
    %133 = math.tanh %132 : vector<16x128xf32>
    %cst_52 = arith.constant 1.000000e+00 : f32
    %134 = vector.broadcast %cst_52 : f32 to vector<16x128xf32>
    %135 = arith.addf %134, %133 : vector<16x128xf32>
    %136 = arith.mulf %125, %135 : vector<16x128xf32>
    %137 = arith.truncf %136 : vector<16x128xf32> to vector<16x128xbf16>
    %c0_53 = arith.constant 0 : index
    %c0_54 = arith.constant 0 : index
    %c0_55 = arith.constant 0 : index
    %138 = vector.load %arg8[%c0_53, %c0_54, %c0_55] : memref<2x128x32xbf16, #tpu.memory_space<vmem>>, vector<1x128x32xbf16>
    %139 = vector.shape_cast %138 : vector<1x128x32xbf16> to vector<128x32xbf16>
    %cst_56 = arith.constant dense<0.000000e+00> : vector<16x32xf32>
    %140 = tpu.matmul %137, %139, %cst_56 {dimension_numbers = #tpu.dot_dimension_numbers<[1], [0], [0], [1], [0, 0, 1, 1], [], []>} : vector<16x128xbf16>, vector<128x32xbf16>, vector<16x32xf32> -> vector<16x32xf32>
    %141 = vector.extract_strided_slice %31 {offsets = [6, 0], sizes = [1, 32], strides = [1, 1]} : vector<9x32xf32> to vector<1x32xf32>
    %142 = vector.broadcast %141 : vector<1x32xf32> to vector<16x32xf32>
    %143 = arith.addf %140, %142 : vector<16x32xf32>
    %144 = arith.addf %115, %143 : vector<16x32xf32>
    %145 = vector.extract_strided_slice %31 {offsets = [7, 0], sizes = [1, 32], strides = [1, 1]} : vector<9x32xf32> to vector<1x32xf32>
    %146 = vector.extract_strided_slice %31 {offsets = [8, 0], sizes = [1, 32], strides = [1, 1]} : vector<9x32xf32> to vector<1x32xf32>
    %cst_57 = arith.constant dense<0.000000e+00> : vector<16xf32>
    %147 = vector.multi_reduction <add>, %144, %cst_57 [1] : vector<16x32xf32> to vector<16xf32>
    %148 = vector.shape_cast %147 : vector<16xf32> to vector<16x1xf32>
    %cst_58 = arith.constant 3.125000e-02 : f32
    %149 = vector.broadcast %cst_58 : f32 to vector<16x1xf32>
    %150 = arith.mulf %148, %149 : vector<16x1xf32>
    %151 = arith.mulf %144, %144 : vector<16x32xf32>
    %cst_59 = arith.constant dense<0.000000e+00> : vector<16xf32>
    %152 = vector.multi_reduction <add>, %151, %cst_59 [1] : vector<16x32xf32> to vector<16xf32>
    %153 = vector.shape_cast %152 : vector<16xf32> to vector<16x1xf32>
    %cst_60 = arith.constant 3.125000e-02 : f32
    %154 = vector.broadcast %cst_60 : f32 to vector<16x1xf32>
    %155 = arith.mulf %153, %154 : vector<16x1xf32>
    %156 = arith.mulf %150, %150 : vector<16x1xf32>
    %157 = arith.subf %155, %156 : vector<16x1xf32>
    %cst_61 = arith.constant 0.000000e+00 : f32
    %158 = vector.broadcast %cst_61 : f32 to vector<16x1xf32>
    %159 = arith.maximumf %157, %158 : vector<16x1xf32>
    %160 = vector.broadcast %150 : vector<16x1xf32> to vector<16x32xf32>
    %161 = arith.subf %144, %160 : vector<16x32xf32>
    %cst_62 = arith.constant 9.99999996E-13 : f32
    %162 = vector.broadcast %cst_62 : f32 to vector<16x1xf32>
    %163 = arith.addf %159, %162 : vector<16x1xf32>
    %164 = math.rsqrt %163 : vector<16x1xf32>
    %165 = vector.broadcast %164 : vector<16x1xf32> to vector<16x32xf32>
    %166 = arith.mulf %161, %165 : vector<16x32xf32>
    %167 = vector.broadcast %145 : vector<1x32xf32> to vector<16x32xf32>
    %168 = arith.mulf %166, %167 : vector<16x32xf32>
    %169 = vector.broadcast %146 : vector<1x32xf32> to vector<16x32xf32>
    %170 = arith.addf %168, %169 : vector<16x32xf32>
    %c1_63 = arith.constant 1 : index
    %c0_64 = arith.constant 0 : index
    %c0_65 = arith.constant 0 : index
    %171 = vector.load %arg9[%c1_63, %c0_64, %c0_65] : memref<2x9x32xf32, #tpu.memory_space<vmem>>, vector<1x9x32xf32>
    %172 = vector.shape_cast %171 : vector<1x9x32xf32> to vector<9x32xf32>
    %173 = arith.truncf %170 : vector<16x32xf32> to vector<16x32xbf16>
    %c1_66 = arith.constant 1 : index
    %c0_67 = arith.constant 0 : index
    %c0_68 = arith.constant 0 : index
    %c0_69 = arith.constant 0 : index
    %174 = vector.load %arg5[%c1_66, %c0_67, %c0_68, %c0_69] : memref<2x4x32x32xbf16, #tpu.memory_space<vmem>>, vector<1x1x32x32xbf16>
    %175 = vector.shape_cast %174 : vector<1x1x32x32xbf16> to vector<32x32xbf16>
    %cst_70 = arith.constant dense<0.000000e+00> : vector<16x32xf32>
    %176 = tpu.matmul %173, %175, %cst_70 {dimension_numbers = #tpu.dot_dimension_numbers<[1], [0], [0], [1], [0, 0, 1, 1], [], []>} : vector<16x32xbf16>, vector<32x32xbf16>, vector<16x32xf32> -> vector<16x32xf32>
    %177 = vector.extract_strided_slice %172 {offsets = [0, 0], sizes = [1, 32], strides = [1, 1]} : vector<9x32xf32> to vector<1x32xf32>
    %178 = vector.broadcast %177 : vector<1x32xf32> to vector<16x32xf32>
    %179 = arith.addf %176, %178 : vector<16x32xf32>
    %c1_71 = arith.constant 1 : index
    %c1_72 = arith.constant 1 : index
    %c0_73 = arith.constant 0 : index
    %c0_74 = arith.constant 0 : index
    %180 = vector.load %arg5[%c1_71, %c1_72, %c0_73, %c0_74] : memref<2x4x32x32xbf16, #tpu.memory_space<vmem>>, vector<1x1x32x32xbf16>
    %181 = vector.shape_cast %180 : vector<1x1x32x32xbf16> to vector<32x32xbf16>
    %cst_75 = arith.constant dense<0.000000e+00> : vector<16x32xf32>
    %182 = tpu.matmul %173, %181, %cst_75 {dimension_numbers = #tpu.dot_dimension_numbers<[1], [0], [0], [1], [0, 0, 1, 1], [], []>} : vector<16x32xbf16>, vector<32x32xbf16>, vector<16x32xf32> -> vector<16x32xf32>
    %183 = vector.extract_strided_slice %172 {offsets = [1, 0], sizes = [1, 32], strides = [1, 1]} : vector<9x32xf32> to vector<1x32xf32>
    %184 = vector.broadcast %183 : vector<1x32xf32> to vector<16x32xf32>
    %185 = arith.addf %182, %184 : vector<16x32xf32>
    %c1_76 = arith.constant 1 : index
    %c2_77 = arith.constant 2 : index
    %c0_78 = arith.constant 0 : index
    %c0_79 = arith.constant 0 : index
    %186 = vector.load %arg5[%c1_76, %c2_77, %c0_78, %c0_79] : memref<2x4x32x32xbf16, #tpu.memory_space<vmem>>, vector<1x1x32x32xbf16>
    %187 = vector.shape_cast %186 : vector<1x1x32x32xbf16> to vector<32x32xbf16>
    %cst_80 = arith.constant dense<0.000000e+00> : vector<16x32xf32>
    %188 = tpu.matmul %173, %187, %cst_80 {dimension_numbers = #tpu.dot_dimension_numbers<[1], [0], [0], [1], [0, 0, 1, 1], [], []>} : vector<16x32xbf16>, vector<32x32xbf16>, vector<16x32xf32> -> vector<16x32xf32>
    %189 = vector.extract_strided_slice %172 {offsets = [2, 0], sizes = [1, 32], strides = [1, 1]} : vector<9x32xf32> to vector<1x32xf32>
    %190 = vector.broadcast %189 : vector<1x32xf32> to vector<16x32xf32>
    %191 = arith.addf %188, %190 : vector<16x32xf32>
    %192 = tpu.concatenate %179, %179 in 0 : vector<16x32xf32>, vector<16x32xf32> -> vector<32x32xf32>
    %193 = vector.extract_strided_slice %29 {offsets = [0, 0], sizes = [1, 32], strides = [1, 1]} : vector<2x32xf32> to vector<1x32xf32>
    %194 = vector.broadcast %193 : vector<1x32xf32> to vector<16x32xf32>
    %195 = arith.mulf %185, %194 : vector<16x32xf32>
    %196 = vector.extract_strided_slice %29 {offsets = [1, 0], sizes = [1, 32], strides = [1, 1]} : vector<2x32xf32> to vector<1x32xf32>
    %197 = vector.broadcast %196 : vector<1x32xf32> to vector<16x32xf32>
    %198 = arith.mulf %185, %197 : vector<16x32xf32>
    %199 = tpu.concatenate %195, %198 in 0 : vector<16x32xf32>, vector<16x32xf32> -> vector<32x32xf32>
    %200 = vector.extract_strided_slice %29 {offsets = [0, 0], sizes = [1, 32], strides = [1, 1]} : vector<2x32xf32> to vector<1x32xf32>
    %201 = vector.broadcast %200 : vector<1x32xf32> to vector<16x32xf32>
    %202 = arith.mulf %191, %201 : vector<16x32xf32>
    %203 = vector.extract_strided_slice %29 {offsets = [1, 0], sizes = [1, 32], strides = [1, 1]} : vector<2x32xf32> to vector<1x32xf32>
    %204 = vector.broadcast %203 : vector<1x32xf32> to vector<16x32xf32>
    %205 = arith.mulf %191, %204 : vector<16x32xf32>
    %206 = tpu.concatenate %202, %205 in 0 : vector<16x32xf32>, vector<16x32xf32> -> vector<32x32xf32>
    %cst_81 = arith.constant dense<0.000000e+00> : vector<32x32xf32>
    %207 = tpu.matmul %192, %199, %cst_81 {dimension_numbers = #tpu.dot_dimension_numbers<[1], [1], [0], [0], [0, 0, 1, 0], [], []>} : vector<32x32xf32>, vector<32x32xf32>, vector<32x32xf32> -> vector<32x32xf32>
    %208 = arith.addf %207, %28 : vector<32x32xf32>
    %cst_82 = arith.constant dense<0xFF800000> : vector<32xf32>
    %209 = vector.multi_reduction <maximumf>, %208, %cst_82 [1] : vector<32x32xf32> to vector<32xf32>
    %210 = vector.shape_cast %209 : vector<32xf32> to vector<32x1xf32>
    %211 = vector.broadcast %210 : vector<32x1xf32> to vector<32x32xf32>
    %212 = arith.subf %208, %211 : vector<32x32xf32>
    %213 = math.exp %212 : vector<32x32xf32>
    %cst_83 = arith.constant dense<0.000000e+00> : vector<32xf32>
    %214 = vector.multi_reduction <add>, %213, %cst_83 [1] : vector<32x32xf32> to vector<32xf32>
    %215 = vector.shape_cast %214 : vector<32xf32> to vector<32x1xf32>
    %216 = tpu.reciprocal %215 {approx = true} : vector<32x1xf32> -> vector<32x1xf32>
    %217 = vector.broadcast %216 : vector<32x1xf32> to vector<32x32xf32>
    %218 = arith.mulf %213, %217 : vector<32x32xf32>
    %cst_84 = arith.constant dense<0.000000e+00> : vector<32x32xf32>
    %219 = tpu.matmul %218, %206, %cst_84 {dimension_numbers = #tpu.dot_dimension_numbers<[1], [0], [0], [1], [0, 0, 1, 1], [], []>} : vector<32x32xf32>, vector<32x32xf32>, vector<32x32xf32> -> vector<32x32xf32>
    %220 = vector.extract_strided_slice %219 {offsets = [0, 0], sizes = [16, 32], strides = [1, 1]} : vector<32x32xf32> to vector<16x32xf32>
    %221 = vector.extract_strided_slice %219 {offsets = [16, 0], sizes = [16, 32], strides = [1, 1]} : vector<32x32xf32> to vector<16x32xf32>
    %222 = arith.addf %220, %221 : vector<16x32xf32>
    %223 = arith.truncf %222 : vector<16x32xf32> to vector<16x32xbf16>
    %c1_85 = arith.constant 1 : index
    %c3_86 = arith.constant 3 : index
    %c0_87 = arith.constant 0 : index
    %c0_88 = arith.constant 0 : index
    %224 = vector.load %arg5[%c1_85, %c3_86, %c0_87, %c0_88] : memref<2x4x32x32xbf16, #tpu.memory_space<vmem>>, vector<1x1x32x32xbf16>
    %225 = vector.shape_cast %224 : vector<1x1x32x32xbf16> to vector<32x32xbf16>
    %cst_89 = arith.constant dense<0.000000e+00> : vector<16x32xf32>
    %226 = tpu.matmul %223, %225, %cst_89 {dimension_numbers = #tpu.dot_dimension_numbers<[1], [0], [0], [1], [0, 0, 1, 1], [], []>} : vector<16x32xbf16>, vector<32x32xbf16>, vector<16x32xf32> -> vector<16x32xf32>
    %227 = vector.extract_strided_slice %172 {offsets = [3, 0], sizes = [1, 32], strides = [1, 1]} : vector<9x32xf32> to vector<1x32xf32>
    %228 = vector.broadcast %227 : vector<1x32xf32> to vector<16x32xf32>
    %229 = arith.addf %226, %228 : vector<16x32xf32>
    %230 = arith.addf %170, %229 : vector<16x32xf32>
    %231 = vector.extract_strided_slice %172 {offsets = [4, 0], sizes = [1, 32], strides = [1, 1]} : vector<9x32xf32> to vector<1x32xf32>
    %232 = vector.extract_strided_slice %172 {offsets = [5, 0], sizes = [1, 32], strides = [1, 1]} : vector<9x32xf32> to vector<1x32xf32>
    %cst_90 = arith.constant dense<0.000000e+00> : vector<16xf32>
    %233 = vector.multi_reduction <add>, %230, %cst_90 [1] : vector<16x32xf32> to vector<16xf32>
    %234 = vector.shape_cast %233 : vector<16xf32> to vector<16x1xf32>
    %cst_91 = arith.constant 3.125000e-02 : f32
    %235 = vector.broadcast %cst_91 : f32 to vector<16x1xf32>
    %236 = arith.mulf %234, %235 : vector<16x1xf32>
    %237 = arith.mulf %230, %230 : vector<16x32xf32>
    %cst_92 = arith.constant dense<0.000000e+00> : vector<16xf32>
    %238 = vector.multi_reduction <add>, %237, %cst_92 [1] : vector<16x32xf32> to vector<16xf32>
    %239 = vector.shape_cast %238 : vector<16xf32> to vector<16x1xf32>
    %cst_93 = arith.constant 3.125000e-02 : f32
    %240 = vector.broadcast %cst_93 : f32 to vector<16x1xf32>
    %241 = arith.mulf %239, %240 : vector<16x1xf32>
    %242 = arith.mulf %236, %236 : vector<16x1xf32>
    %243 = arith.subf %241, %242 : vector<16x1xf32>
    %cst_94 = arith.constant 0.000000e+00 : f32
    %244 = vector.broadcast %cst_94 : f32 to vector<16x1xf32>
    %245 = arith.maximumf %243, %244 : vector<16x1xf32>
    %246 = vector.broadcast %236 : vector<16x1xf32> to vector<16x32xf32>
    %247 = arith.subf %230, %246 : vector<16x32xf32>
    %cst_95 = arith.constant 9.99999996E-13 : f32
    %248 = vector.broadcast %cst_95 : f32 to vector<16x1xf32>
    %249 = arith.addf %245, %248 : vector<16x1xf32>
    %250 = math.rsqrt %249 : vector<16x1xf32>
    %251 = vector.broadcast %250 : vector<16x1xf32> to vector<16x32xf32>
    %252 = arith.mulf %247, %251 : vector<16x32xf32>
    %253 = vector.broadcast %231 : vector<1x32xf32> to vector<16x32xf32>
    %254 = arith.mulf %252, %253 : vector<16x32xf32>
    %255 = vector.broadcast %232 : vector<1x32xf32> to vector<16x32xf32>
    %256 = arith.addf %254, %255 : vector<16x32xf32>
    %257 = arith.truncf %256 : vector<16x32xf32> to vector<16x32xbf16>
    %c1_96 = arith.constant 1 : index
    %c0_97 = arith.constant 0 : index
    %c0_98 = arith.constant 0 : index
    %258 = vector.load %arg6[%c1_96, %c0_97, %c0_98] : memref<2x32x128xbf16, #tpu.memory_space<vmem>>, vector<1x32x128xbf16>
    %259 = vector.shape_cast %258 : vector<1x32x128xbf16> to vector<32x128xbf16>
    %cst_99 = arith.constant dense<0.000000e+00> : vector<16x128xf32>
    %260 = tpu.matmul %257, %259, %cst_99 {dimension_numbers = #tpu.dot_dimension_numbers<[1], [0], [0], [1], [0, 0, 1, 1], [], []>} : vector<16x32xbf16>, vector<32x128xbf16>, vector<16x128xf32> -> vector<16x128xf32>
    %c1_100 = arith.constant 1 : index
    %c0_101 = arith.constant 0 : index
    %c0_102 = arith.constant 0 : index
    %261 = vector.load %arg7[%c1_100, %c0_101, %c0_102] : memref<2x1x128xf32, #tpu.memory_space<vmem>>, vector<1x1x128xf32>
    %262 = vector.shape_cast %261 : vector<1x1x128xf32> to vector<1x128xf32>
    %263 = vector.broadcast %262 : vector<1x128xf32> to vector<16x128xf32>
    %264 = arith.addf %260, %263 : vector<16x128xf32>
    %cst_103 = arith.constant 5.000000e-01 : f32
    %265 = vector.broadcast %cst_103 : f32 to vector<16x128xf32>
    %266 = arith.mulf %265, %264 : vector<16x128xf32>
    %cst_104 = arith.constant 4.471500e-02 : f32
    %267 = vector.broadcast %cst_104 : f32 to vector<16x128xf32>
    %268 = arith.mulf %267, %264 : vector<16x128xf32>
    %269 = arith.mulf %268, %264 : vector<16x128xf32>
    %270 = arith.mulf %269, %264 : vector<16x128xf32>
    %271 = arith.addf %264, %270 : vector<16x128xf32>
    %cst_105 = arith.constant 0.797884583 : f32
    %272 = vector.broadcast %cst_105 : f32 to vector<16x128xf32>
    %273 = arith.mulf %272, %271 : vector<16x128xf32>
    %274 = math.tanh %273 : vector<16x128xf32>
    %cst_106 = arith.constant 1.000000e+00 : f32
    %275 = vector.broadcast %cst_106 : f32 to vector<16x128xf32>
    %276 = arith.addf %275, %274 : vector<16x128xf32>
    %277 = arith.mulf %266, %276 : vector<16x128xf32>
    %278 = arith.truncf %277 : vector<16x128xf32> to vector<16x128xbf16>
    %c1_107 = arith.constant 1 : index
    %c0_108 = arith.constant 0 : index
    %c0_109 = arith.constant 0 : index
    %279 = vector.load %arg8[%c1_107, %c0_108, %c0_109] : memref<2x128x32xbf16, #tpu.memory_space<vmem>>, vector<1x128x32xbf16>
    %280 = vector.shape_cast %279 : vector<1x128x32xbf16> to vector<128x32xbf16>
    %cst_110 = arith.constant dense<0.000000e+00> : vector<16x32xf32>
    %281 = tpu.matmul %278, %280, %cst_110 {dimension_numbers = #tpu.dot_dimension_numbers<[1], [0], [0], [1], [0, 0, 1, 1], [], []>} : vector<16x128xbf16>, vector<128x32xbf16>, vector<16x32xf32> -> vector<16x32xf32>
    %282 = vector.extract_strided_slice %172 {offsets = [6, 0], sizes = [1, 32], strides = [1, 1]} : vector<9x32xf32> to vector<1x32xf32>
    %283 = vector.broadcast %282 : vector<1x32xf32> to vector<16x32xf32>
    %284 = arith.addf %281, %283 : vector<16x32xf32>
    %285 = arith.addf %256, %284 : vector<16x32xf32>
    %286 = vector.extract_strided_slice %172 {offsets = [7, 0], sizes = [1, 32], strides = [1, 1]} : vector<9x32xf32> to vector<1x32xf32>
    %287 = vector.extract_strided_slice %172 {offsets = [8, 0], sizes = [1, 32], strides = [1, 1]} : vector<9x32xf32> to vector<1x32xf32>
    %cst_111 = arith.constant dense<0.000000e+00> : vector<16xf32>
    %288 = vector.multi_reduction <add>, %285, %cst_111 [1] : vector<16x32xf32> to vector<16xf32>
    %289 = vector.shape_cast %288 : vector<16xf32> to vector<16x1xf32>
    %cst_112 = arith.constant 3.125000e-02 : f32
    %290 = vector.broadcast %cst_112 : f32 to vector<16x1xf32>
    %291 = arith.mulf %289, %290 : vector<16x1xf32>
    %292 = arith.mulf %285, %285 : vector<16x32xf32>
    %cst_113 = arith.constant dense<0.000000e+00> : vector<16xf32>
    %293 = vector.multi_reduction <add>, %292, %cst_113 [1] : vector<16x32xf32> to vector<16xf32>
    %294 = vector.shape_cast %293 : vector<16xf32> to vector<16x1xf32>
    %cst_114 = arith.constant 3.125000e-02 : f32
    %295 = vector.broadcast %cst_114 : f32 to vector<16x1xf32>
    %296 = arith.mulf %294, %295 : vector<16x1xf32>
    %297 = arith.mulf %291, %291 : vector<16x1xf32>
    %298 = arith.subf %296, %297 : vector<16x1xf32>
    %cst_115 = arith.constant 0.000000e+00 : f32
    %299 = vector.broadcast %cst_115 : f32 to vector<16x1xf32>
    %300 = arith.maximumf %298, %299 : vector<16x1xf32>
    %301 = vector.broadcast %291 : vector<16x1xf32> to vector<16x32xf32>
    %302 = arith.subf %285, %301 : vector<16x32xf32>
    %cst_116 = arith.constant 9.99999996E-13 : f32
    %303 = vector.broadcast %cst_116 : f32 to vector<16x1xf32>
    %304 = arith.addf %300, %303 : vector<16x1xf32>
    %305 = math.rsqrt %304 : vector<16x1xf32>
    %306 = vector.broadcast %305 : vector<16x1xf32> to vector<16x32xf32>
    %307 = arith.mulf %302, %306 : vector<16x32xf32>
    %308 = vector.broadcast %286 : vector<1x32xf32> to vector<16x32xf32>
    %309 = arith.mulf %307, %308 : vector<16x32xf32>
    %310 = vector.broadcast %287 : vector<1x32xf32> to vector<16x32xf32>
    %311 = arith.addf %309, %310 : vector<16x32xf32>
    %c0_117 = arith.constant 0 : index
    %c0_118 = arith.constant 0 : index
    %312 = vector.load %arg10[%c0_117, %c0_118] : memref<16x32xf32, #tpu.memory_space<vmem>>, vector<16x32xf32>
    tpu.vector_store %arg10[%c0_117, %c0_118], %311 {strides = array<i32>} : memref<16x32xf32, #tpu.memory_space<vmem>>, vector<16x32xf32>,
    return
  }
  func.func @transform_0(%arg0: i32) -> (i32, i32) {
    %c0_i32 = arith.constant 0 : i32
    %c0_i32_0 = arith.constant 0 : i32
    %c0_i32_1 = arith.constant 0 : i32
    return %c0_i32, %c0_i32_0 : i32, i32
  }
  func.func @transform_1(%arg0: i32) -> (i32, i32) {
    %c0_i32 = arith.constant 0 : i32
    %c0_i32_0 = arith.constant 0 : i32
    %c0_i32_1 = arith.constant 0 : i32
    return %c0_i32, %c0_i32_0 : i32, i32
  }
  func.func @transform_2(%arg0: i32) -> (i32, i32) {
    %c0_i32 = arith.constant 0 : i32
    %c0_i32_0 = arith.constant 0 : i32
    %c0_i32_1 = arith.constant 0 : i32
    return %c0_i32, %c0_i32_0 : i32, i32
  }
  func.func @transform_3(%arg0: i32) -> (i32, i32) {
    %c0_i32 = arith.constant 0 : i32
    %c0_i32_0 = arith.constant 0 : i32
    %c0_i32_1 = arith.constant 0 : i32
    return %c0_i32, %c0_i32_0 : i32, i32
  }
  func.func @transform_4(%arg0: i32) -> (i32, i32, i32, i32) {
    %c0_i32 = arith.constant 0 : i32
    %c0_i32_0 = arith.constant 0 : i32
    %c0_i32_1 = arith.constant 0 : i32
    %c0_i32_2 = arith.constant 0 : i32
    %c0_i32_3 = arith.constant 0 : i32
    return %c0_i32, %c0_i32_0, %c0_i32_1, %c0_i32_2 : i32, i32, i32, i32
  }
  func.func @transform_5(%arg0: i32) -> (i32, i32, i32) {
    %c0_i32 = arith.constant 0 : i32
    %c0_i32_0 = arith.constant 0 : i32
    %c0_i32_1 = arith.constant 0 : i32
    %c0_i32_2 = arith.constant 0 : i32
    return %c0_i32, %c0_i32_0, %c0_i32_1 : i32, i32, i32
  }
  func.func @transform_6(%arg0: i32) -> (i32, i32, i32) {
    %c0_i32 = arith.constant 0 : i32
    %c0_i32_0 = arith.constant 0 : i32
    %c0_i32_1 = arith.constant 0 : i32
    %c0_i32_2 = arith.constant 0 : i32
    return %c0_i32, %c0_i32_0, %c0_i32_1 : i32, i32, i32
  }
  func.func @transform_7(%arg0: i32) -> (i32, i32, i32) {
    %c0_i32 = arith.constant 0 : i32
    %c0_i32_0 = arith.constant 0 : i32
    %c0_i32_1 = arith.constant 0 : i32
    %c0_i32_2 = arith.constant 0 : i32
    return %c0_i32, %c0_i32_0, %c0_i32_1 : i32, i32, i32
  }
  func.func @transform_8(%arg0: i32) -> (i32, i32, i32) {
    %c0_i32 = arith.constant 0 : i32
    %c0_i32_0 = arith.constant 0 : i32
    %c0_i32_1 = arith.constant 0 : i32
    %c0_i32_2 = arith.constant 0 : i32
    return %c0_i32, %c0_i32_0, %c0_i32_1 : i32, i32, i32
  }
  func.func @transform_9(%arg0: i32) -> (i32, i32) {
    %c0_i32 = arith.constant 0 : i32
    %c0_i32_0 = arith.constant 0 : i32
    %c0_i32_1 = arith.constant 0 : i32
    return %c0_i32, %c0_i32_0 : i32, i32
  }
}

</mosaic_0001>

<llo_original>
// kernel: tile.8
$region0: #{tile.8}
  #allocation0 [shape = 's32[1]{0}', space=sflag, size = 0x4, scoped, tag = 'scoped memory for tile.8']
  %s0 = inlined_call_operand.vmem [shape: f32[16,16], index: 0, kind: input, shape index: {}]
  %s1 = inlined_call_operand.vmem [shape: f32[2,16,2,16], index: 1, kind: output, shape index: {}]
  // Predicated region
  $region2: #{tile.8} parent=0 // pred_check
    _
  $region3: #{tile.8} parent=0 // pred_check_branch
    %3 = sbr.rel (0) target = $region5
  $region4: #{tile.8} parent=0 // pred_region
    _
  $region5: #{tile.8} parent=0 // pred_fallthru
    _
  %v4 = vld [vmem:[%s0] ss:$0 sm:$0xff]
  %5 = vst [vmem:[%s1] sm:$0x3] %v4
  %s6 = scalar_lea.vmem %s1, 32
  %7 = vst [vmem:[%s6] sm:$0x3] %v4
  %s8 = scalar_lea.vmem %s0, 1
  %v9 = vld [vmem:[%s8] ss:$0 sm:$0xff]
  %s10 = scalar_lea.vmem %s1, 2
  %11 = vst [vmem:[%s10] sm:$0x3] %v9
  %s12 = scalar_lea.vmem %s1, 34
  %13 = vst [vmem:[%s12] sm:$0x3] %v9
  %s14 = scalar_lea.vmem %s0, 2
  %v15 = vld [vmem:[%s14] ss:$0 sm:$0xff]
  %s16 = scalar_lea.vmem %s1, 4
  %17 = vst [vmem:[%s16] sm:$0x3] %v15
  %s18 = scalar_lea.vmem %s1, 36
  %19 = vst [vmem:[%s18] sm:$0x3] %v15
  %s20 = scalar_lea.vmem %s0, 3
  %v21 = vld [vmem:[%s20] ss:$0 sm:$0xff]
  %s22 = scalar_lea.vmem %s1, 6
  %23 = vst [vmem:[%s22] sm:$0x3] %v21
  %s24 = scalar_lea.vmem %s1, 38
  %25 = vst [vmem:[%s24] sm:$0x3] %v21
  %s26 = scalar_lea.vmem %s0, 4
  %v27 = vld [vmem:[%s26] ss:$0 sm:$0xff]
  %s28 = scalar_lea.vmem %s1, 8
  %29 = vst [vmem:[%s28] sm:$0x3] %v27
  %s30 = scalar_lea.vmem %s1, 40
  %31 = vst [vmem:[%s30] sm:$0x3] %v27
  %s32 = scalar_lea.vmem %s0, 5
  %v33 = vld [vmem:[%s32] ss:$0 sm:$0xff]
  %s34 = scalar_lea.vmem %s1, 10
  %35 = vst [vmem:[%s34] sm:$0x3] %v33
  %s36 = scalar_lea.vmem %s1, 42
  %37 = vst [vmem:[%s36] sm:$0x3] %v33
  %s38 = scalar_lea.vmem %s0, 6
  %v39 = vld [vmem:[%s38] ss:$0 sm:$0xff]
  %s40 = scalar_lea.vmem %s1, 12
  %41 = vst [vmem:[%s40] sm:$0x3] %v39
  %s42 = scalar_lea.vmem %s1, 44
  %43 = vst [vmem:[%s42] sm:$0x3] %v39
  %s44 = scalar_lea.vmem %s0, 7
  %v45 = vld [vmem:[%s44] ss:$0 sm:$0xff]
  %s46 = scalar_lea.vmem %s1, 14
  %47 = vst [vmem:[%s46] sm:$0x3] %v45
  %s48 = scalar_lea.vmem %s1, 46
  %49 = vst [vmem:[%s48] sm:$0x3] %v45
  %s50 = scalar_lea.vmem %s0, 8
  %v51 = vld [vmem:[%s50] ss:$0 sm:$0xff]
  %s52 = scalar_lea.vmem %s1, 16
  %53 = vst [vmem:[%s52] sm:$0x3] %v51
  %s54 = scalar_lea.vmem %s1, 48
  %55 = vst [vmem:[%s54] sm:$0x3] %v51
  %s56 = scalar_lea.vmem %s0, 8
  %s57 = scalar_lea.vmem %s56, 1
  %v58 = vld [vmem:[%s57] ss:$0 sm:$0xff]
  %s59 = scalar_lea.vmem %s1, 18
  %60 = vst [vmem:[%s59] sm:$0x3] %v58
  %s61 = scalar_lea.vmem %s1, 50
  %62 = vst [vmem:[%s61] sm:$0x3] %v58
  %s63 = scalar_lea.vmem %s0, 8
  %s64 = scalar_lea.vmem %s63, 2
  %v65 = vld [vmem:[%s64] ss:$0 sm:$0xff]
  %s66 = scalar_lea.vmem %s1, 20
  %67 = vst [vmem:[%s66] sm:$0x3] %v65
  %s68 = scalar_lea.vmem %s1, 52
  %69 = vst [vmem:[%s68] sm:$0x3] %v65
  %s70 = scalar_lea.vmem %s0, 8
  %s71 = scalar_lea.vmem %s70, 3
  %v72 = vld [vmem:[%s71] ss:$0 sm:$0xff]
  %s73 = scalar_lea.vmem %s1, 22
  %74 = vst [vmem:[%s73] sm:$0x3] %v72
  %s75 = scalar_lea.vmem %s1, 54
  %76 = vst [vmem:[%s75] sm:$0x3] %v72
  %s77 = scalar_lea.vmem %s0, 8
  %s78 = scalar_lea.vmem %s77, 4
  %v79 = vld [vmem:[%s78] ss:$0 sm:$0xff]
  %s80 = scalar_lea.vmem %s1, 24
  %81 = vst [vmem:[%s80] sm:$0x3] %v79
  %s82 = scalar_lea.vmem %s1, 56
  %83 = vst [vmem:[%s82] sm:$0x3] %v79
  %s84 = scalar_lea.vmem %s0, 8
  %s85 = scalar_lea.vmem %s84, 5
  %v86 = vld [vmem:[%s85] ss:$0 sm:$0xff]
  %s87 = scalar_lea.vmem %s1, 26
  %88 = vst [vmem:[%s87] sm:$0x3] %v86
  %s89 = scalar_lea.vmem %s1, 58
  %90 = vst [vmem:[%s89] sm:$0x3] %v86
  %s91 = scalar_lea.vmem %s0, 8
  %s92 = scalar_lea.vmem %s91, 6
  %v93 = vld [vmem:[%s92] ss:$0 sm:$0xff]
  %s94 = scalar_lea.vmem %s1, 28
  %95 = vst [vmem:[%s94] sm:$0x3] %v93
  %s96 = scalar_lea.vmem %s1, 60
  %97 = vst [vmem:[%s96] sm:$0x3] %v93
  %s98 = scalar_lea.vmem %s0, 8
  %s99 = scalar_lea.vmem %s98, 7
  %v100 = vld [vmem:[%s99] ss:$0 sm:$0xff]
  %s101 = scalar_lea.vmem %s1, 30
  %102 = vst [vmem:[%s101] sm:$0x3] %v100
  %s103 = scalar_lea.vmem %s1, 62
  %104 = vst [vmem:[%s103] sm:$0x3] %v100

// kernel: eq.29
$region0: #{eq.29}
  %s0 = inlined_call_operand.vmem [shape: s32[2,16], index: 0, kind: input, shape index: {}]
  %s1 = inlined_call_operand.vmem [shape: s32[32], index: 1, kind: output, shape index: {}]
  $region1: #{eq.29} parent=0
    #allocation0 [shape = 'u8[4096]{0}', space=vmem, size = 0x1000, scoped, tag = 'scoped mem for output reshape']
    #allocation1 [shape = 'u8[4096]{0}', space=vmem, size = 0x1000, scoped, tag = 'scoped mem for input reshape']
    %s3 = sshllo.u32 0, 2
    %v4 = vld [vmem:[%s0] sm:%s3]
    %5 = vst [vmem:[#allocation1] sm:%s3] %v4
    %v6 = vld [vmem:[#allocation1] sm:$0x1]
    %vm7 = vcmask 130048
    %8 = vst.msk [vmem:[#allocation0] sm:$0x1] %vm7, %v6
    %s9 = scalar_lea.vmem [#allocation1], 1
    %v10 = vld [vmem:[%s9] sm:$0x1]
    %11 = vrot.lane.b32.xlu0 %v10, 16
    %v12 = vpop.permute.xlu0 %11
    %vm13 = vcmask 261248
    %14 = vst.msk [vmem:[#allocation0] sm:$0x1] %vm13, %v12
    %s16 = sshllo.u32 0, 1
    %v18 = vld [vmem:[#allocation0] sm:%s16]
    %s19 = sshllo.u32 0, 1
    %20 = vst [vmem:[%s1] sm:%s19] %v18

// kernel: tile.9
$region0: #{tile.9}
  %s0 = inlined_call_operand.vmem [shape: f32[2,16,2,16], index: 0, kind: input, shape index: {}]
  %s1 = inlined_call_operand.vmem [shape: f32[32,32], index: 1, kind: output, shape index: {}]
  $region1: #{tile.9} parent=0
    #allocation0 [shape = 'u8[131072]{0}', space=vmem, size = 0x20000, scoped, tag = 'scoped mem for input reshape']
    %s3 = sshllo.u32 0, 2
    %s4 = smul.addr 2, 31
    %s5 = scalar_lea.vmem %s0, %s4
    %v6 = vld [vmem:[%s5] sm:%s3]
    %s7 = scalar_lea.vmem [#allocation0], 248
    %8 = vst [vmem:[%s7] sm:%s3] %v6
    %s9 = smul.addr 2, 30
    %s10 = scalar_lea.vmem %s0, %s9
    %v11 = vld [vmem:[%s10] sm:%s3]
    %s12 = scalar_lea.vmem [#allocation0], 240
    %13 = vst [vmem:[%s12] sm:%s3] %v11
    %s14 = smul.addr 2, 29
    %s15 = scalar_lea.vmem %s0, %s14
    %v16 = vld [vmem:[%s15] sm:%s3]
    %s17 = scalar_lea.vmem [#allocation0], 232
    %18 = vst [vmem:[%s17] sm:%s3] %v16
    %s19 = smul.addr 2, 28
    %s20 = scalar_lea.vmem %s0, %s19
    %v21 = vld [vmem:[%s20] sm:%s3]
    %s22 = scalar_lea.vmem [#allocation0], 224
    %23 = vst [vmem:[%s22] sm:%s3] %v21
    %s24 = smul.addr 2, 27
    %s25 = scalar_lea.vmem %s0, %s24
    %v26 = vld [vmem:[%s25] sm:%s3]
    %s27 = scalar_lea.vmem [#allocation0], 216
    %28 = vst [vmem:[%s27] sm:%s3] %v26
    %s29 = smul.addr 2, 26
    %s30 = scalar_lea.vmem %s0, %s29
    %v31 = vld [vmem:[%s30] sm:%s3]
    %s32 = scalar_lea.vmem [#allocation0], 208
    %33 = vst [vmem:[%s32] sm:%s3] %v31
    %s34 = smul.addr 2, 25
    %s35 = scalar_lea.vmem %s0, %s34
    %v36 = vld [vmem:[%s35] sm:%s3]
    %s37 = scalar_lea.vmem [#allocation0], 200
    %38 = vst [vmem:[%s37] sm:%s3] %v36
    %s39 = smul.addr 2, 24
    %s40 = scalar_lea.vmem %s0, %s39
    %v41 = vld [vmem:[%s40] sm:%s3]
    %s42 = scalar_lea.vmem [#allocation0], 192
    %43 = vst [vmem:[%s42] sm:%s3] %v41
    %s44 = smul.addr 2, 23
    %s45 = scalar_lea.vmem %s0, %s44
    %v46 = vld [vmem:[%s45] sm:%s3]
    %s47 = scalar_lea.vmem [#allocation0], 184
    %48 = vst [vmem:[%s47] sm:%s3] %v46
    %s49 = smul.addr 2, 22
    %s50 = scalar_lea.vmem %s0, %s49
    %v51 = vld [vmem:[%s50] sm:%s3]
    %s52 = scalar_lea.vmem [#allocation0], 176
    %53 = vst [vmem:[%s52] sm:%s3] %v51
    %s54 = smul.addr 2, 21
    %s55 = scalar_lea.vmem %s0, %s54
    %v56 = vld [vmem:[%s55] sm:%s3]
    %s57 = scalar_lea.vmem [#allocation0], 168
    %58 = vst [vmem:[%s57] sm:%s3] %v56
    %s59 = smul.addr 2, 20
    %s60 = scalar_lea.vmem %s0, %s59
    %v61 = vld [vmem:[%s60] sm:%s3]
    %s62 = scalar_lea.vmem [#allocation0], 160
    %63 = vst [vmem:[%s62] sm:%s3] %v61
    %s64 = smul.addr 2, 19
    %s65 = scalar_lea.vmem %s0, %s64
    %v66 = vld [vmem:[%s65] sm:%s3]
    %s67 = scalar_lea.vmem [#allocation0], 152
    %68 = vst [vmem:[%s67] sm:%s3] %v66
    %s69 = smul.addr 2, 18
    %s70 = scalar_lea.vmem %s0, %s69
    %v71 = vld [vmem:[%s70] sm:%s3]
    %s72 = scalar_lea.vmem [#allocation0], 144
    %73 = vst [vmem:[%s72] sm:%s3] %v71
    %s74 = smul.addr 2, 17
    %s75 = scalar_lea.vmem %s0, %s74
    %v76 = vld [vmem:[%s75] sm:%s3]
    %s77 = scalar_lea.vmem [#allocation0], 136
    %78 = vst [vmem:[%s77] sm:%s3] %v76
    %s79 = smul.addr 2, 16
    %s80 = scalar_lea.vmem %s0, %s79
    %v81 = vld [vmem:[%s80] sm:%s3]
    %s82 = scalar_lea.vmem [#allocation0], 128
    %83 = vst [vmem:[%s82] sm:%s3] %v81
    %s84 = smul.addr 2, 15
    %s85 = scalar_lea.vmem %s0, %s84
    %v86 = vld [vmem:[%s85] sm:%s3]
    %s87 = scalar_lea.vmem [#allocation0], 120
    %88 = vst [vmem:[%s87] sm:%s3] %v86
    %s89 = smul.addr 2, 14
    %s90 = scalar_lea.vmem %s0, %s89
    %v91 = vld [vmem:[%s90] sm:%s3]
    %s92 = scalar_lea.vmem [#allocation0], 112
    %93 = vst [vmem:[%s92] sm:%s3] %v91
    %s94 = smul.addr 2, 13
    %s95 = scalar_lea.vmem %s0, %s94
    %v96 = vld [vmem:[%s95] sm:%s3]
    %s97 = scalar_lea.vmem [#allocation0], 104
    %98 = vst [vmem:[%s97] sm:%s3] %v96
    %s99 = smul.addr 2, 12
    %s100 = scalar_lea.vmem %s0, %s99
    %v101 = vld [vmem:[%s100] sm:%s3]
    %s102 = scalar_lea.vmem [#allocation0], 96
    %103 = vst [vmem:[%s102] sm:%s3] %v101
    %s104 = smul.addr 2, 11
    %s105 = scalar_lea.vmem %s0, %s104
    %v106 = vld [vmem:[%s105] sm:%s3]
    %s107 = scalar_lea.vmem [#allocation0], 88
    %108 = vst [vmem:[%s107] sm:%s3] %v106
    %s109 = smul.addr 2, 10
    %s110 = scalar_lea.vmem %s0, %s109
    %v111 = vld [vmem:[%s110] sm:%s3]
    %s112 = scalar_lea.vmem [#allocation0], 80
    %113 = vst [vmem:[%s112] sm:%s3] %v111
    %s114 = smul.addr 2, 9
    %s115 = scalar_lea.vmem %s0, %s114
    %v116 = vld [vmem:[%s115] sm:%s3]
    %s117 = scalar_lea.vmem [#allocation0], 72
    %118 = vst [vmem:[%s117] sm:%s3] %v116
    %s119 = smul.addr 2, 8
    %s120 = scalar_lea.vmem %s0, %s119
    %v121 = vld [vmem:[%s120] sm:%s3]
    %s122 = scalar_lea.vmem [#allocation0], 64
    %123 = vst [vmem:[%s122] sm:%s3] %v121
    %s124 = smul.addr 2, 7
    %s125 = scalar_lea.vmem %s0, %s124
    %v126 = vld [vmem:[%s125] sm:%s3]
    %s127 = scalar_lea.vmem [#allocation0], 56
    %128 = vst [vmem:[%s127] sm:%s3] %v126
    %s129 = smul.addr 2, 6
    %s130 = scalar_lea.vmem %s0, %s129
    %v131 = vld [vmem:[%s130] sm:%s3]
    %s132 = scalar_lea.vmem [#allocation0], 48
    %133 = vst [vmem:[%s132] sm:%s3] %v131
    %s134 = smul.addr 2, 5
    %s135 = scalar_lea.vmem %s0, %s134
    %v136 = vld [vmem:[%s135] sm:%s3]
    %s137 = scalar_lea.vmem [#allocation0], 40
    %138 = vst [vmem:[%s137] sm:%s3] %v136
    %s139 = smul.addr 2, 4
    %s140 = scalar_lea.vmem %s0, %s139
    %v141 = vld [vmem:[%s140] sm:%s3]
    %s142 = scalar_lea.vmem [#allocation0], 32
    %143 = vst [vmem:[%s142] sm:%s3] %v141
    %s144 = smul.addr 2, 3
    %s145 = scalar_lea.vmem %s0, %s144
    %v146 = vld [vmem:[%s145] sm:%s3]
    %s147 = scalar_lea.vmem [#allocation0], 24
    %148 = vst [vmem:[%s147] sm:%s3] %v146
    %s149 = smul.addr 2, 2
    %s150 = scalar_lea.vmem %s0, %s149
    %v151 = vld [vmem:[%s150] sm:%s3]
    %s152 = scalar_lea.vmem [#allocation0], 16
    %153 = vst [vmem:[%s152] sm:%s3] %v151
    %s154 = scalar_lea.vmem %s0, 2
    %v155 = vld [vmem:[%s154] sm:%s3]
    %s156 = scalar_lea.vmem [#allocation0], 8
    %157 = vst [vmem:[%s156] sm:%s3] %v155
    %v158 = vld [vmem:[%s0] sm:%s3]
    %159 = vst [vmem:[#allocation0] sm:%s3] %v158
    %v160 = vld [vmem:[#allocation0] ss:$8 sm:$0xf]
    %v161 = vld [vmem:[#allocation0] ss:$8 sm:$0xf0]
    %vm162 = vcmask 1047556
    %v163 = vsel %vm162, %v161, %v160
    %vm164 = vcmask 130048
    %165 = vst.msk [vmem:[%s1] sm:$0xff] %vm164, %v163
    %s166 = scalar_lea.vmem [#allocation0], 64
    %v167 = vld [vmem:[%s166] ss:$8 sm:$0xf]
    %s168 = scalar_lea.vmem [#allocation0], 64
    %v169 = vld [vmem:[%s168] ss:$8 sm:$0xf0]
    %vm170 = vcmask 1047556
    %v171 = vsel %vm170, %v169, %v167
    %vm172 = vcmask 130048
    %s173 = scalar_lea.vmem %s1, 8
    %174 = vst.msk [vmem:[%s173] sm:$0xff] %vm172, %v171
    %s175 = scalar_lea.vmem [#allocation0], 128
    %v176 = vld [vmem:[%s175] ss:$8 sm:$0xf]
    %s177 = scalar_lea.vmem [#allocation0], 128
    %v178 = vld [vmem:[%s177] ss:$8 sm:$0xf0]
    %vm179 = vcmask 1047556
    %v180 = vsel %vm179, %v178, %v176
    %vm181 = vcmask 130048
    %s182 = scalar_lea.vmem %s1, 16
    %183 = vst.msk [vmem:[%s182] sm:$0xff] %vm181, %v180
    %s184 = scalar_lea.vmem [#allocation0], 192
    %v185 = vld [vmem:[%s184] ss:$8 sm:$0xf]
    %s186 = scalar_lea.vmem [#allocation0], 192
    %v187 = vld [vmem:[%s186] ss:$8 sm:$0xf0]
    %vm188 = vcmask 1047556
    %v189 = vsel %vm188, %v187, %v185
    %vm190 = vcmask 130048
    %s191 = scalar_lea.vmem %s1, 24
    %192 = vst.msk [vmem:[%s191] sm:$0xff] %vm190, %v189
    %s193 = scalar_lea.vmem [#allocation0], 1
    %v194 = vld [vmem:[%s193] ss:$8 sm:$0xf]
    %s195 = scalar_lea.vmem [#allocation0], 1
    %v196 = vld [vmem:[%s195] ss:$8 sm:$0xf0]
    %vm197 = vcmask 1047556
    %v198 = vsel %vm197, %v196, %v194
    %199 = vrot.lane.b32.xlu0 %v198, 16
    %v200 = vpop.permute.xlu0 %199
    %vm201 = vcmask 261248
    %202 = vst.msk [vmem:[%s1] sm:$0xff] %vm201, %v200
    %s203 = scalar_lea.vmem [#allocation0], 65
    %v204 = vld [vmem:[%s203] ss:$8 sm:$0xf]
    %s205 = scalar_lea.vmem [#allocation0], 65
    %v206 = vld [vmem:[%s205] ss:$8 sm:$0xf0]
    %vm207 = vcmask 1047556
    %v208 = vsel %vm207, %v206, %v204
    %209 = vrot.lane.b32.xlu0 %v208, 16
    %v210 = vpop.permute.xlu0 %209
    %vm211 = vcmask 261248
    %s212 = scalar_lea.vmem %s1, 8
    %213 = vst.msk [vmem:[%s212] sm:$0xff] %vm211, %v210
    %s214 = scalar_lea.vmem [#allocation0], 129
    %v215 = vld [vmem:[%s214] ss:$8 sm:$0xf]
    %s216 = scalar_lea.vmem [#allocation0], 129
    %v217 = vld [vmem:[%s216] ss:$8 sm:$0xf0]
    %vm218 = vcmask 1047556
    %v219 = vsel %vm218, %v217, %v215
    %220 = vrot.lane.b32.xlu0 %v219, 16
    %v221 = vpop.permute.xlu0 %220
    %vm222 = vcmask 261248
    %s223 = scalar_lea.vmem %s1, 16
    %224 = vst.msk [vmem:[%s223] sm:$0xff] %vm222, %v221
    %s225 = scalar_lea.vmem [#allocation0], 193
    %v226 = vld [vmem:[%s225] ss:$8 sm:$0xf]
    %s227 = scalar_lea.vmem [#allocation0], 193
    %v228 = vld [vmem:[%s227] ss:$8 sm:$0xf0]
    %vm229 = vcmask 1047556
    %v230 = vsel %vm229, %v228, %v226
    %231 = vrot.lane.b32.xlu0 %v230, 16
    %v232 = vpop.permute.xlu0 %231
    %vm233 = vcmask 261248
    %s234 = scalar_lea.vmem %s1, 24
    %235 = vst.msk [vmem:[%s234] sm:$0xff] %vm233, %v232

// kernel: transformer_net_forward.1
$region0: #{transformer_net_forward.1}
  #allocation0 [shape = 'u32[]', space=smem, size = 0x4, offset = 0x4, fixed_abs, tag = 'smem constant byte address 0x4 - core index']
  #allocation1 [shape = 'u32[144,128]{1,0:T(1,128)}', space=vmem, size = 0x12000, scoped, tag = 'internal scratch']
  %s0 = inlined_call_operand.vmem [shape: f32[16,32], index: 0, kind: input, shape index: {}]
  %s1 = inlined_call_operand.vmem [shape: f32[32,32], index: 1, kind: input, shape index: {}]
  %s2 = inlined_call_operand.vmem [shape: f32[2,32], index: 2, kind: input, shape index: {}]
  %s3 = inlined_call_operand.vmem [shape: f32[2,32], index: 3, kind: input, shape index: {}]
  %s4 = inlined_call_operand.vmem [shape: bf16[2,4,32,32], index: 4, kind: input, shape index: {}]
  %s5 = inlined_call_operand.vmem [shape: bf16[2,32,128], index: 5, kind: input, shape index: {}]
  %s6 = inlined_call_operand.vmem [shape: f32[2,1,128], index: 6, kind: input, shape index: {}]
  %s7 = inlined_call_operand.vmem [shape: bf16[2,128,32], index: 7, kind: input, shape index: {}]
  %s8 = inlined_call_operand.vmem [shape: f32[2,9,32], index: 8, kind: input, shape index: {}]
  %s9 = inlined_call_operand.hbm [shape: f32[16,32], index: 9, kind: output, shape index: {}]
  %s10 = sld [smem:[#allocation0]]
  $region46: #{transformer_net_forward.1} parent=0
    _
  %s12 = ssub.s32 1, %s10
  %s13 = scalar_select 0, %s12, %s10
  $region1: #{transformer_net_forward.1} parent=0
    #allocation2 [shape = 'u8[8192]{0}', space=vmem, size = 0x2000, scoped, tag = 'output window, operand 0, single buffered']
    #allocation3 [shape = 's32[1]{0}', space=sflag, size = 0x4, scoped, tag = 'scoped memory for transformer_net_forward.1']
    %14 = vsyncpa [#allocation3], 0
    // Predicated region
    $region2: #{transformer_net_forward.1} parent=1 // pred_check
      _
    $region3: #{transformer_net_forward.1} parent=1 // pred_check_branch
      %16 = sbr.rel (0) target = $region5
    $region4: #{transformer_net_forward.1} parent=1 // pred_region
      _
    $region5: #{transformer_net_forward.1} parent=1 // pred_fallthru
      _
    // Predicated region
    $region6: #{transformer_net_forward.1} parent=1 // pred_check
      _
    $region7: #{transformer_net_forward.1} parent=1 // pred_check_branch
      %18 = sbr.rel (0) target = $region9
    $region8: #{transformer_net_forward.1} parent=1 // pred_region
      _
    $region9: #{transformer_net_forward.1} parent=1 // pred_fallthru
      _
    // Predicated region
    $region10: #{transformer_net_forward.1} parent=1 // pred_check
      _
    $region11: #{transformer_net_forward.1} parent=1 // pred_check_branch
      %20 = sbr.rel (0) target = $region13
    $region12: #{transformer_net_forward.1} parent=1 // pred_region
      _
    $region13: #{transformer_net_forward.1} parent=1 // pred_fallthru
      _
    // Predicated region
    $region14: #{transformer_net_forward.1} parent=1 // pred_check
      _
    $region15: #{transformer_net_forward.1} parent=1 // pred_check_branch
      %22 = sbr.rel (0) target = $region17
    $region16: #{transformer_net_forward.1} parent=1 // pred_region
      _
    $region17: #{transformer_net_forward.1} parent=1 // pred_fallthru
      _
    // Predicated region
    $region18: #{transformer_net_forward.1} parent=1 // pred_check
      _
    $region19: #{transformer_net_forward.1} parent=1 // pred_check_branch
      %24 = sbr.rel (0) target = $region21
    $region20: #{transformer_net_forward.1} parent=1 // pred_region
      _
    $region21: #{transformer_net_forward.1} parent=1 // pred_fallthru
      _
    // Predicated region
    $region22: #{transformer_net_forward.1} parent=1 // pred_check
      _
    $region23: #{transformer_net_forward.1} parent=1 // pred_check_branch
      %26 = sbr.rel (0) target = $region25
    $region24: #{transformer_net_forward.1} parent=1 // pred_region
      _
    $region25: #{transformer_net_forward.1} parent=1 // pred_fallthru
      _
    // Predicated region
    $region26: #{transformer_net_forward.1} parent=1 // pred_check
      _
    $region27: #{transformer_net_forward.1} parent=1 // pred_check_branch
      %28 = sbr.rel (0) target = $region29
    $region28: #{transformer_net_forward.1} parent=1 // pred_region
      _
    $region29: #{transformer_net_forward.1} parent=1 // pred_fallthru
      _
    // Predicated region
    $region30: #{transformer_net_forward.1} parent=1 // pred_check
      _
    $region31: #{transformer_net_forward.1} parent=1 // pred_check_branch
      %30 = sbr.rel (0) target = $region33
    $region32: #{transformer_net_forward.1} parent=1 // pred_region
      _
    $region33: #{transformer_net_forward.1} parent=1 // pred_fallthru
      _
    // Predicated region
    $region34: #{transformer_net_forward.1} parent=1 // pred_check
      _
    $region35: #{transformer_net_forward.1} parent=1 // pred_check_branch
      %32 = sbr.rel (0) target = $region37
    $region36: #{transformer_net_forward.1} parent=1 // pred_region
      _
    $region37: #{transformer_net_forward.1} parent=1 // pred_fallthru
      _
    %v34 = vld [vmem:[%s2] sm:$0x3]
    %v35 = vld [vmem:[%s0] sm:$0xff]
    %v36 = vld [vmem:[%s0 + $0x8] sm:$0xff]
    %vm37 = vcmask 261120
    %v38 = vsel %vm37, %v35, 0.0
    %39 = vadd.xlane.f32.xlu0 %v38
    %v40 = vpop.xlane.xlu0 %39
    %v41 = vsel %vm37, %v36, 0.0
    %42 = vadd.xlane.f32.xlu0 %v41
    %v43 = vpop.xlane.xlu0 %42
    %v44 = vmul.f32 %v40, 0.03125
    %v45 = vmul.f32 %v43, 0.03125
    %v46 = vmul.f32 %v35, %v35
    %v47 = vmul.f32 %v36, %v36
    %v48 = vsel %vm37, %v46, 0.0
    %49 = vadd.xlane.f32.xlu0 %v48
    %v50 = vpop.xlane.xlu0 %49
    %v51 = vsel %vm37, %v47, 0.0
    %52 = vadd.xlane.f32.xlu0 %v51
    %v53 = vpop.xlane.xlu0 %52
    %v54 = vmul.f32 %v50, 0.03125
    %v55 = vmul.f32 %v53, 0.03125
    %v56 = vmul.f32 %v44, %v44
    %v57 = vmul.f32 %v45, %v45
    %v58 = vsub.f32 %v54, %v56
    %v59 = vsub.f32 %v55, %v57
    %v60 = vmax.f32 %v58, 0.0
    %v61 = vmax.f32 %v59, 0.0
    %v62 = vsub.f32 %v35, %v44
    %v63 = vsub.f32 %v36, %v45
    %v64 = vadd.f32 %v60, 1e-12
    %v65 = vadd.f32 %v61, 1e-12
    %v66 = vrsqrt.pop %v64
    %v67 = vrsqrt.pop %v65
    %v68 = vmul.f32 %v62, %v66
    %v69 = vmul.f32 %v63, %v67
    %v70 = vlaneseq
    %v71 = vshrl.u32 %v70, 7
    %v72 = vsub.s32 0, %v71
    %v73 = vrot.slane %v34, %v72
    %v74 = vmul.f32 %v68, %v73
    %v75 = vmul.f32 %v69, %v73
    %v76 = vlaneseq
    %v77 = vshrl.u32 %v76, 7
    %v78 = vsub.s32 1, %v77
    %v79 = vrot.slane %v34, %v78
    %v80 = vadd.f32 %v74, %v79
    %v81 = vadd.f32 %v75, %v79
    %v82 = vld [vmem:[%s1] sm:$0xff]
    %v83 = vld [vmem:[%s1 + $0x8] sm:$0xff]
    %v84 = vld [vmem:[%s1 + $0x10] sm:$0xff]
    %v85 = vld [vmem:[%s1 + $0x18] sm:$0xff]
    %v86 = vld [vmem:[%s3] sm:$0x3]
    %v87 = vld [vmem:[%s8] sm:$0xff]
    %v88 = vld [vmem:[%s8 + $0x8] sm:$0x1]
    %v89 = vpack.c.bf16 %v81, %v80
    %v90 = vld [vmem:[%s4] sm:$0xf]
    %v91 = vld [vmem:[%s4 + $0x4] sm:$0xf]
    %v92 = vld [vmem:[%s4 + $0x8] sm:$0xf]
    %v93 = vld [vmem:[%s4 + $0xc] sm:$0xf]
    %v94 = vlaneseq
    %v95 = vshrl.u32 %v94, 7
    %v96 = vsub.s32 0, %v95
    %v97 = vrot.slane %v87, %v96
    %v102 = vunpack.c.l.b16 %v90
    %v103 = vunpack.c.l.b16 %v91
    %v104 = vunpack.c.l.b16 %v92
    %v105 = vunpack.c.l.b16 %v93
    %v106 = vpack.c.b16 %v103, %v102
    %v107 = vpack.c.b16 %v105, %v104
    %v111 = vsel %vm37, %v89, 0
    %113 = vmatprep.subr.bf16.mxu0 0
    %114 = vmatpush1.bf16.msra.mxu0 %v106
    %115 = vmatprep.subr.bf16.mxu0 0
    %116 = vmatpush1.bf16.msra.mxu0 %v107
    %117 = vmatprep.subr.bf16.mxu0 0
    %118 = vmatpush1.bf16.msra.mxu0 0
    %119 = vmatprep.subr.bf16.mxu0 0
    %120 = vmatpush1.bf16.msra.mxu0 0
    %121 = vmatprep.subr.bf16.mxu0 0
    %122 = vmatpush1.bf16.msra.mxu0 0
    %123 = vmatprep.subr.bf16.mxu0 0
    %124 = vmatpush1.bf16.msra.mxu0 0
    %125 = vmatprep.subr.bf16.mxu0 0
    %126 = vmatpush1.bf16.msra.mxu0 0
    %127 = vmatprep.subr.bf16.mxu0 0
    %128 = vmatpush1.bf16.msra.mxu0 0
    %129 = vmatprep.subr.bf16.mxu0 0
    %130 = vmatpush1.bf16.msra.mxu0 0
    %131 = vmatprep.subr.bf16.mxu0 0
    %132 = vmatpush1.bf16.msra.mxu0 0
    %133 = vmatprep.subr.bf16.mxu0 0
    %134 = vmatpush1.bf16.msra.mxu0 0
    %135 = vmatprep.subr.bf16.mxu0 0
    %136 = vmatpush1.bf16.msra.mxu0 0
    %137 = vmatprep.subr.bf16.mxu0 0
    %138 = vmatpush1.bf16.msra.mxu0 0
    %139 = vmatprep.subr.bf16.mxu0 0
    %140 = vmatpush1.bf16.msra.mxu0 0
    %141 = vmatprep.subr.bf16.mxu0 0
    %142 = vmatpush1.bf16.msra.mxu0 0
    %143 = vmatprep.subr.bf16.mxu0 0
    %144 = vmatpush1.bf16.msra.mxu0 0
    %145 = vmatprep.mubr.bf16.mxu0 0
    %146 = vmatmul.mubr.bf16.gmra.mrb[0].mxu0 %v111
    %v147 = vpop.f32.mrb[0].mxu0
    %v148 = vadd.f32 %v97, %v147
    %v149 = vpop.f32.mrb[0].mxu0
    %v150 = vpop.f32.mrb[0].mxu0
    %v151 = vadd.f32 %v97, %v150
    %v152 = vpop.f32.mrb[0].mxu0
    %153 = vdwg.mxu0
    %s154 = scalar_lea.vmem %s4, 16
    %v155 = vld [vmem:[%s154] sm:$0xf]
    %v156 = vld [vmem:[%s154 + $0x4] sm:$0xf]
    %v157 = vld [vmem:[%s154 + $0x8] sm:$0xf]
    %v158 = vld [vmem:[%s154 + $0xc] sm:$0xf]
    %v159 = vlaneseq
    %v160 = vshrl.u32 %v159, 7
    %v161 = vsub.s32 1, %v160
    %v162 = vrot.slane %v87, %v161
    %v167 = vunpack.c.l.b16 %v155
    %v168 = vunpack.c.l.b16 %v156
    %v169 = vunpack.c.l.b16 %v157
    %v170 = vunpack.c.l.b16 %v158
    %v171 = vpack.c.b16 %v168, %v167
    %v172 = vpack.c.b16 %v170, %v169
    %175 = vmatprep.subr.bf16.mxu0 0
    %176 = vmatpush1.bf16.msra.mxu0 %v171
    %177 = vmatprep.subr.bf16.mxu0 0
    %178 = vmatpush1.bf16.msra.mxu0 %v172
    %179 = vmatprep.subr.bf16.mxu0 0
    %180 = vmatpush1.bf16.msra.mxu0 0
    %181 = vmatprep.subr.bf16.mxu0 0
    %182 = vmatpush1.bf16.msra.mxu0 0
    %183 = vmatprep.subr.bf16.mxu0 0
    %184 = vmatpush1.bf16.msra.mxu0 0
    %185 = vmatprep.subr.bf16.mxu0 0
    %186 = vmatpush1.bf16.msra.mxu0 0
    %187 = vmatprep.subr.bf16.mxu0 0
    %188 = vmatpush1.bf16.msra.mxu0 0
    %189 = vmatprep.subr.bf16.mxu0 0
    %190 = vmatpush1.bf16.msra.mxu0 0
    %191 = vmatprep.subr.bf16.mxu0 0
    %192 = vmatpush1.bf16.msra.mxu0 0
    %193 = vmatprep.subr.bf16.mxu0 0
    %194 = vmatpush1.bf16.msra.mxu0 0
    %195 = vmatprep.subr.bf16.mxu0 0
    %196 = vmatpush1.bf16.msra.mxu0 0
    %197 = vmatprep.subr.bf16.mxu0 0
    %198 = vmatpush1.bf16.msra.mxu0 0
    %199 = vmatprep.subr.bf16.mxu0 0
    %200 = vmatpush1.bf16.msra.mxu0 0
    %201 = vmatprep.subr.bf16.mxu0 0
    %202 = vmatpush1.bf16.msra.mxu0 0
    %203 = vmatprep.subr.bf16.mxu0 0
    %204 = vmatpush1.bf16.msra.mxu0 0
    %205 = vmatprep.subr.bf16.mxu0 0
    %206 = vmatpush1.bf16.msra.mxu0 0
    %207 = vmatprep.mubr.bf16.mxu0 0
    %208 = vmatmul.mubr.bf16.gmra.mrb[0].mxu0 %v111
    %v209 = vpop.f32.mrb[0].mxu0
    %v210 = vadd.f32 %v162, %v209
    %v211 = vpop.f32.mrb[0].mxu0
    %v212 = vpop.f32.mrb[0].mxu0
    %v213 = vadd.f32 %v162, %v212
    %v214 = vpop.f32.mrb[0].mxu0
    %215 = vdwg.mxu0
    %s216 = scalar_lea.vmem %s4, 32
    %v217 = vld [vmem:[%s216] sm:$0xf]
    %v218 = vld [vmem:[%s216 + $0x4] sm:$0xf]
    %v219 = vld [vmem:[%s216 + $0x8] sm:$0xf]
    %v220 = vld [vmem:[%s216 + $0xc] sm:$0xf]
    %v221 = vlaneseq
    %v222 = vshrl.u32 %v221, 7
    %v223 = vsub.s32 2, %v222
    %v224 = vrot.slane %v87, %v223
    %v229 = vunpack.c.l.b16 %v217
    %v230 = vunpack.c.l.b16 %v218
    %v231 = vunpack.c.l.b16 %v219
    %v232 = vunpack.c.l.b16 %v220
    %v233 = vpack.c.b16 %v230, %v229
    %v234 = vpack.c.b16 %v232, %v231
    %237 = vmatprep.subr.bf16.mxu0 0
    %238 = vmatpush1.bf16.msra.mxu0 %v233
    %239 = vmatprep.subr.bf16.mxu0 0
    %240 = vmatpush1.bf16.msra.mxu0 %v234
    %241 = vmatprep.subr.bf16.mxu0 0
    %242 = vmatpush1.bf16.msra.mxu0 0
    %243 = vmatprep.subr.bf16.mxu0 0
    %244 = vmatpush1.bf16.msra.mxu0 0
    %245 = vmatprep.subr.bf16.mxu0 0
    %246 = vmatpush1.bf16.msra.mxu0 0
    %247 = vmatprep.subr.bf16.mxu0 0
    %248 = vmatpush1.bf16.msra.mxu0 0
    %249 = vmatprep.subr.bf16.mxu0 0
    %250 = vmatpush1.bf16.msra.mxu0 0
    %251 = vmatprep.subr.bf16.mxu0 0
    %252 = vmatpush1.bf16.msra.mxu0 0
    %253 = vmatprep.subr.bf16.mxu0 0
    %254 = vmatpush1.bf16.msra.mxu0 0
    %255 = vmatprep.subr.bf16.mxu0 0
    %256 = vmatpush1.bf16.msra.mxu0 0
    %257 = vmatprep.subr.bf16.mxu0 0
    %258 = vmatpush1.bf16.msra.mxu0 0
    %259 = vmatprep.subr.bf16.mxu0 0
    %260 = vmatpush1.bf16.msra.mxu0 0
    %261 = vmatprep.subr.bf16.mxu0 0
    %262 = vmatpush1.bf16.msra.mxu0 0
    %263 = vmatprep.subr.bf16.mxu0 0
    %264 = vmatpush1.bf16.msra.mxu0 0
    %265 = vmatprep.subr.bf16.mxu0 0
    %266 = vmatpush1.bf16.msra.mxu0 0
    %267 = vmatprep.subr.bf16.mxu0 0
    %268 = vmatpush1.bf16.msra.mxu0 0
    %269 = vmatprep.mubr.bf16.mxu0 0
    %270 = vmatmul.mubr.bf16.gmra.mrb[0].mxu0 %v111
    %v271 = vpop.f32.mrb[0].mxu0
    %v272 = vadd.f32 %v224, %v271
    %v273 = vpop.f32.mrb[0].mxu0
    %v274 = vpop.f32.mrb[0].mxu0
    %v275 = vadd.f32 %v224, %v274
    %v276 = vpop.f32.mrb[0].mxu0
    %277 = vdwg.mxu0
    %v278 = vlaneseq
    %v279 = vshrl.u32 %v278, 7
    %v280 = vsub.s32 0, %v279
    %v281 = vrot.slane %v86, %v280
    %v282 = vmul.f32 %v210, %v281
    %v283 = vmul.f32 %v213, %v281
    %v284 = vlaneseq
    %v285 = vshrl.u32 %v284, 7
    %v286 = vsub.s32 1, %v285
    %v287 = vrot.slane %v86, %v286
    %v288 = vmul.f32 %v210, %v287
    %v289 = vmul.f32 %v213, %v287
    %v290 = vmul.f32 %v272, %v281
    %v291 = vmul.f32 %v275, %v281
    %v292 = vmul.f32 %v272, %v287
    %v293 = vmul.f32 %v275, %v287
    %v295 = vsel %vm37, %v148, 0
    %v298 = vsel %vm37, %v151, 0
    %v301 = vsel %vm37, %v282, 0
    %v304 = vsel %vm37, %v283, 0
    %v307 = vsel %vm37, %v288, 0
    %v310 = vsel %vm37, %v289, 0
    %312 = vmatprep.subr.mxu0 0.0
    %313 = vmatpush1.xpose.msra.mxu0 %v301
    %314 = vmatprep.subr.mxu0 0.0
    %315 = vmatpush1.xpose.msra.mxu0 %v304
    %316 = vmatprep.subr.mxu0 0.0
    %317 = vmatpush1.xpose.msra.mxu0 %v307
    %318 = vmatprep.subr.mxu0 0.0
    %319 = vmatpush1.xpose.msra.mxu0 %v310
    %320 = vmatprep.subr.mxu0 0.0
    %321 = vmatpush1.xpose.msra.mxu0 0.0
    %322 = vmatprep.subr.mxu0 0.0
    %323 = vmatpush1.xpose.msra.mxu0 0.0
    %324 = vmatprep.subr.mxu0 0.0
    %325 = vmatpush1.xpose.msra.mxu0 0.0
    %326 = vmatprep.subr.mxu0 0.0
    %327 = vmatpush1.xpose.msra.mxu0 0.0
    %328 = vmatprep.subr.mxu0 0.0
    %329 = vmatpush1.xpose.msra.mxu0 0.0
    %330 = vmatprep.subr.mxu0 0.0
    %331 = vmatpush1.xpose.msra.mxu0 0.0
    %332 = vmatprep.subr.mxu0 0.0
    %333 = vmatpush1.xpose.msra.mxu0 0.0
    %334 = vmatprep.subr.mxu0 0.0
    %335 = vmatpush1.xpose.msra.mxu0 0.0
    %336 = vmatprep.subr.mxu0 0.0
    %337 = vmatpush1.xpose.msra.mxu0 0.0
    %338 = vmatprep.subr.mxu0 0.0
    %339 = vmatpush1.xpose.msra.mxu0 0.0
    %340 = vmatprep.subr.mxu0 0.0
    %341 = vmatpush1.xpose.msra.mxu0 0.0
    %342 = vmatprep.subr.mxu0 0.0
    %343 = vmatpush1.xpose.msra.mxu0 0.0
    %344 = vmatprep.subr.mxu0 0.0
    %345 = vmatpush1.xpose.msra.mxu0 0.0
    %346 = vmatprep.subr.mxu0 0.0
    %347 = vmatpush1.xpose.msra.mxu0 0.0
    %348 = vmatprep.subr.mxu0 0.0
    %349 = vmatpush1.xpose.msra.mxu0 0.0
    %350 = vmatprep.subr.mxu0 0.0
    %351 = vmatpush1.xpose.msra.mxu0 0.0
    %352 = vmatprep.subr.mxu0 0.0
    %353 = vmatpush1.xpose.msra.mxu0 0.0
    %354 = vmatprep.subr.mxu0 0.0
    %355 = vmatpush1.xpose.msra.mxu0 0.0
    %356 = vmatprep.subr.mxu0 0.0
    %357 = vmatpush1.xpose.msra.mxu0 0.0
    %358 = vmatprep.subr.mxu0 0.0
    %359 = vmatpush1.xpose.msra.mxu0 0.0
    %360 = vmatprep.subr.mxu0 0.0
    %361 = vmatpush1.xpose.msra.mxu0 0.0
    %362 = vmatprep.subr.mxu0 0.0
    %363 = vmatpush1.xpose.msra.mxu0 0.0
    %364 = vmatprep.subr.mxu0 0.0
    %365 = vmatpush1.xpose.msra.mxu0 0.0
    %366 = vmatprep.subr.mxu0 0.0
    %367 = vmatpush1.xpose.msra.mxu0 0.0
    %368 = vmatprep.subr.mxu0 0.0
    %369 = vmatpush1.xpose.msra.mxu0 0.0
    %370 = vmatprep.subr.mxu0 0.0
    %371 = vmatpush1.xpose.msra.mxu0 0.0
    %372 = vmatprep.subr.mxu0 0.0
    %373 = vmatpush1.xpose.msra.mxu0 0.0
    %374 = vmatprep.subr.mxu0 0.0
    %375 = vmatpush1.xpose.msra.mxu0 0.0
    %376 = vmatprep.mubr.f32.mxu0 0.0
    %377 = vmatmul.mubr.f32.gmra.mrb[0].mxu0 %v295
    %v378 = vpop.f32.mrb[0].mxu0
    %v379 = vadd.f32 %v82, %v378
    %v380 = vpop.f32.mrb[0].mxu0
    %381 = vmatprep.mubr.f32.mxu0 0.0
    %382 = vmatmul.mubr.f32.gmra.mrb[0].mxu0 %v298
    %v383 = vpop.f32.mrb[0].mxu0
    %v384 = vadd.f32 %v83, %v383
    %v385 = vpop.f32.mrb[0].mxu0
    %386 = vmatprep.mubr.f32.mxu0 0.0
    %387 = vmatmul.mubr.f32.gmra.mrb[0].mxu0 %v295
    %v388 = vpop.f32.mrb[0].mxu0
    %v389 = vadd.f32 %v84, %v388
    %v390 = vpop.f32.mrb[0].mxu0
    %391 = vmatprep.mubr.f32.mxu0 0.0
    %392 = vmatmul.mubr.f32.gmra.mrb[0].mxu0 %v298
    %v393 = vpop.f32.mrb[0].mxu0
    %v394 = vadd.f32 %v85, %v393
    %v395 = vpop.f32.mrb[0].mxu0
    %396 = vdwg.mxu0
    %v397 = vsel %vm37, %v379, -inf
    %398 = vmax.xlane.f32.xlu0 %v397
    %v399 = vpop.xlane.xlu0 %398
    %v400 = vsel %vm37, %v384, -inf
    %401 = vmax.xlane.f32.xlu0 %v400
    %v402 = vpop.xlane.xlu0 %401
    %v403 = vsel %vm37, %v389, -inf
    %404 = vmax.xlane.f32.xlu0 %v403
    %v405 = vpop.xlane.xlu0 %404
    %v406 = vsel %vm37, %v394, -inf
    %407 = vmax.xlane.f32.xlu0 %v406
    %v408 = vpop.xlane.xlu0 %407
    %v409 = vsub.f32 %v379, %v399
    %v410 = vsub.f32 %v384, %v402
    %v411 = vsub.f32 %v389, %v405
    %v412 = vsub.f32 %v394, %v408
    %v413 = vmul.f32 %v409, 1.442695
    %v414 = vpow.pop %v413
    %v415 = vmul.f32 %v410, 1.442695
    %v416 = vpow.pop %v415
    %v417 = vmul.f32 %v411, 1.442695
    %v418 = vpow.pop %v417
    %v419 = vmul.f32 %v412, 1.442695
    %v420 = vpow.pop %v419
    %v421 = vsel %vm37, %v414, 0.0
    %422 = vadd.xlane.f32.xlu0 %v421
    %v423 = vpop.xlane.xlu0 %422
    %v424 = vsel %vm37, %v416, 0.0
    %425 = vadd.xlane.f32.xlu0 %v424
    %v426 = vpop.xlane.xlu0 %425
    %v427 = vsel %vm37, %v418, 0.0
    %428 = vadd.xlane.f32.xlu0 %v427
    %v429 = vpop.xlane.xlu0 %428
    %v430 = vsel %vm37, %v420, 0.0
    %431 = vadd.xlane.f32.xlu0 %v430
    %v432 = vpop.xlane.xlu0 %431
    %v433 = vrcp.pop %v423
    %v434 = vrcp.pop %v426
    %v435 = vrcp.pop %v429
    %v436 = vrcp.pop %v432
    %v437 = vmul.f32 %v414, %v433
    %v438 = vmul.f32 %v416, %v434
    %v439 = vmul.f32 %v418, %v435
    %v440 = vmul.f32 %v420, %v436
    %v442 = vsel %vm37, %v437, 0
    %v445 = vsel %vm37, %v438, 0
    %v448 = vsel %vm37, %v439, 0
    %v451 = vsel %vm37, %v440, 0
    %453 = vmatprep.subr.mxu0 0.0
    %454 = vmatpush1.msra.mxu0 %v290
    %455 = vmatprep.subr.mxu0 0.0
    %456 = vmatpush1.msra.mxu0 %v291
    %457 = vmatprep.subr.mxu0 0.0
    %458 = vmatpush1.msra.mxu0 %v292
    %459 = vmatprep.subr.mxu0 0.0
    %460 = vmatpush1.msra.mxu0 %v293
    %461 = vmatprep.subr.mxu0 0.0
    %462 = vmatpush1.msra.mxu0 0.0
    %463 = vmatprep.subr.mxu0 0.0
    %464 = vmatpush1.msra.mxu0 0.0
    %465 = vmatprep.subr.mxu0 0.0
    %466 = vmatpush1.msra.mxu0 0.0
    %467 = vmatprep.subr.mxu0 0.0
    %468 = vmatpush1.msra.mxu0 0.0
    %469 = vmatprep.subr.mxu0 0.0
    %470 = vmatpush1.msra.mxu0 0.0
    %471 = vmatprep.subr.mxu0 0.0
    %472 = vmatpush1.msra.mxu0 0.0
    %473 = vmatprep.subr.mxu0 0.0
    %474 = vmatpush1.msra.mxu0 0.0
    %475 = vmatprep.subr.mxu0 0.0
    %476 = vmatpush1.msra.mxu0 0.0
    %477 = vmatprep.subr.mxu0 0.0
    %478 = vmatpush1.msra.mxu0 0.0
    %479 = vmatprep.subr.mxu0 0.0
    %480 = vmatpush1.msra.mxu0 0.0
    %481 = vmatprep.subr.mxu0 0.0
    %482 = vmatpush1.msra.mxu0 0.0
    %483 = vmatprep.subr.mxu0 0.0
    %484 = vmatpush1.msra.mxu0 0.0
    %485 = vmatprep.subr.mxu0 0.0
    %486 = vmatpush1.msra.mxu0 0.0
    %487 = vmatprep.subr.mxu0 0.0
    %488 = vmatpush1.msra.mxu0 0.0
    %489 = vmatprep.subr.mxu0 0.0
    %490 = vmatpush1.msra.mxu0 0.0
    %491 = vmatprep.subr.mxu0 0.0
    %492 = vmatpush1.msra.mxu0 0.0
    %493 = vmatprep.subr.mxu0 0.0
    %494 = vmatpush1.msra.mxu0 0.0
    %495 = vmatprep.subr.mxu0 0.0
    %496 = vmatpush1.msra.mxu0 0.0
    %497 = vmatprep.subr.mxu0 0.0
    %498 = vmatpush1.msra.mxu0 0.0
    %499 = vmatprep.subr.mxu0 0.0
    %500 = vmatpush1.msra.mxu0 0.0
    %501 = vmatprep.subr.mxu0 0.0
    %502 = vmatpush1.msra.mxu0 0.0
    %503 = vmatprep.subr.mxu0 0.0
    %504 = vmatpush1.msra.mxu0 0.0
    %505 = vmatprep.subr.mxu0 0.0
    %506 = vmatpush1.msra.mxu0 0.0
    %507 = vmatprep.subr.mxu0 0.0
    %508 = vmatpush1.msra.mxu0 0.0
    %509 = vmatprep.subr.mxu0 0.0
    %510 = vmatpush1.msra.mxu0 0.0
    %511 = vmatprep.subr.mxu0 0.0
    %512 = vmatpush1.msra.mxu0 0.0
    %513 = vmatprep.subr.mxu0 0.0
    %514 = vmatpush1.msra.mxu0 0.0
    %515 = vmatprep.subr.mxu0 0.0
    %516 = vmatpush1.msra.mxu0 0.0
    %517 = vmatprep.mubr.f32.mxu0 0.0
    %518 = vmatmul.mubr.f32.gmra.mrb[0].mxu0 %v442
    %v519 = vpop.f32.mrb[0].mxu0
    %v520 = vadd.f32 0.0, %v519
    %v521 = vpop.f32.mrb[0].mxu0
    %522 = vmatprep.mubr.f32.mxu0 0.0
    %523 = vmatmul.mubr.f32.gmra.mrb[0].mxu0 %v445
    %v524 = vpop.f32.mrb[0].mxu0
    %v525 = vadd.f32 0.0, %v524
    %v526 = vpop.f32.mrb[0].mxu0
    %527 = vmatprep.mubr.f32.mxu0 0.0
    %528 = vmatmul.mubr.f32.gmra.mrb[0].mxu0 %v448
    %v529 = vpop.f32.mrb[0].mxu0
    %v530 = vadd.f32 0.0, %v529
    %v531 = vpop.f32.mrb[0].mxu0
    %532 = vmatprep.mubr.f32.mxu0 0.0
    %533 = vmatmul.mubr.f32.gmra.mrb[0].mxu0 %v451
    %v534 = vpop.f32.mrb[0].mxu0
    %v535 = vadd.f32 0.0, %v534
    %v536 = vpop.f32.mrb[0].mxu0
    %537 = vdwg.mxu0
    %v538 = vadd.f32 %v520, %v530
    %v539 = vadd.f32 %v525, %v535
    %v540 = vpack.c.bf16 %v539, %v538
    %s541 = scalar_lea.vmem %s4, 48
    %v542 = vld [vmem:[%s541] sm:$0xf]
    %v543 = vld [vmem:[%s541 + $0x4] sm:$0xf]
    %v544 = vld [vmem:[%s541 + $0x8] sm:$0xf]
    %v545 = vld [vmem:[%s541 + $0xc] sm:$0xf]
    %v546 = vlaneseq
    %v547 = vshrl.u32 %v546, 7
    %v548 = vsub.s32 3, %v547
    %v549 = vrot.slane %v87, %v548
    %v554 = vunpack.c.l.b16 %v542
    %v555 = vunpack.c.l.b16 %v543
    %v556 = vunpack.c.l.b16 %v544
    %v557 = vunpack.c.l.b16 %v545
    %v558 = vpack.c.b16 %v555, %v554
    %v559 = vpack.c.b16 %v557, %v556
    %v563 = vsel %vm37, %v540, 0
    %565 = vmatprep.subr.bf16.mxu0 0
    %566 = vmatpush1.bf16.msra.mxu0 %v558
    %567 = vmatprep.subr.bf16.mxu0 0
    %568 = vmatpush1.bf16.msra.mxu0 %v559
    %569 = vmatprep.subr.bf16.mxu0 0
    %570 = vmatpush1.bf16.msra.mxu0 0
    %571 = vmatprep.subr.bf16.mxu0 0
    %572 = vmatpush1.bf16.msra.mxu0 0
    %573 = vmatprep.subr.bf16.mxu0 0
    %574 = vmatpush1.bf16.msra.mxu0 0
    %575 = vmatprep.subr.bf16.mxu0 0
    %576 = vmatpush1.bf16.msra.mxu0 0
    %577 = vmatprep.subr.bf16.mxu0 0
    %578 = vmatpush1.bf16.msra.mxu0 0
    %579 = vmatprep.subr.bf16.mxu0 0
    %580 = vmatpush1.bf16.msra.mxu0 0
    %581 = vmatprep.subr.bf16.mxu0 0
    %582 = vmatpush1.bf16.msra.mxu0 0
    %583 = vmatprep.subr.bf16.mxu0 0
    %584 = vmatpush1.bf16.msra.mxu0 0
    %585 = vmatprep.subr.bf16.mxu0 0
    %586 = vmatpush1.bf16.msra.mxu0 0
    %587 = vmatprep.subr.bf16.mxu0 0
    %588 = vmatpush1.bf16.msra.mxu0 0
    %589 = vmatprep.subr.bf16.mxu0 0
    %590 = vmatpush1.bf16.msra.mxu0 0
    %591 = vmatprep.subr.bf16.mxu0 0
    %592 = vmatpush1.bf16.msra.mxu0 0
    %593 = vmatprep.subr.bf16.mxu0 0
    %594 = vmatpush1.bf16.msra.mxu0 0
    %595 = vmatprep.subr.bf16.mxu0 0
    %596 = vmatpush1.bf16.msra.mxu0 0
    %597 = vmatprep.mubr.bf16.mxu0 0
    %598 = vmatmul.mubr.bf16.gmra.mrb[0].mxu0 %v563
    %v599 = vpop.f32.mrb[0].mxu0
    %v600 = vadd.f32 %v549, %v599
    %v601 = vpop.f32.mrb[0].mxu0
    %v602 = vpop.f32.mrb[0].mxu0
    %v603 = vadd.f32 %v549, %v602
    %v604 = vpop.f32.mrb[0].mxu0
    %605 = vdwg.mxu0
    %v606 = vadd.f32 %v80, %v600
    %v607 = vadd.f32 %v81, %v603
    %v608 = vsel %vm37, %v606, 0.0
    %609 = vadd.xlane.f32.xlu0 %v608
    %v610 = vpop.xlane.xlu0 %609
    %v611 = vsel %vm37, %v607, 0.0
    %612 = vadd.xlane.f32.xlu0 %v611
    %v613 = vpop.xlane.xlu0 %612
    %v614 = vmul.f32 %v610, 0.03125
    %v615 = vmul.f32 %v613, 0.03125
    %v616 = vmul.f32 %v606, %v606
    %v617 = vmul.f32 %v607, %v607
    %v618 = vsel %vm37, %v616, 0.0
    %619 = vadd.xlane.f32.xlu0 %v618
    %v620 = vpop.xlane.xlu0 %619
    %v621 = vsel %vm37, %v617, 0.0
    %622 = vadd.xlane.f32.xlu0 %v621
    %v623 = vpop.xlane.xlu0 %622
    %v624 = vmul.f32 %v620, 0.03125
    %v625 = vmul.f32 %v623, 0.03125
    %v626 = vmul.f32 %v614, %v614
    %v627 = vmul.f32 %v615, %v615
    %v628 = vsub.f32 %v624, %v626
    %v629 = vsub.f32 %v625, %v627
    %v630 = vmax.f32 %v628, 0.0
    %v631 = vmax.f32 %v629, 0.0
    %v632 = vsub.f32 %v606, %v614
    %v633 = vsub.f32 %v607, %v615
    %v634 = vadd.f32 %v630, 1e-12
    %v635 = vadd.f32 %v631, 1e-12
    %v636 = vrsqrt.pop %v634
    %v637 = vrsqrt.pop %v635
    %v638 = vmul.f32 %v632, %v636
    %v639 = vmul.f32 %v633, %v637
    %v640 = vlaneseq
    %v641 = vshrl.u32 %v640, 7
    %v642 = vsub.s32 4, %v641
    %v643 = vrot.slane %v87, %v642
    %v644 = vmul.f32 %v638, %v643
    %v645 = vmul.f32 %v639, %v643
    %v646 = vlaneseq
    %v647 = vshrl.u32 %v646, 7
    %v648 = vsub.s32 5, %v647
    %v649 = vrot.slane %v87, %v648
    %v650 = vadd.f32 %v644, %v649
    %v651 = vadd.f32 %v645, %v649
    %v652 = vpack.c.bf16 %v651, %v650
    %v653 = vld [vmem:[%s5] sm:$0xf]
    %v654 = vld [vmem:[%s5 + $0x4] sm:$0xf]
    %v655 = vld [vmem:[%s5 + $0x8] sm:$0xf]
    %v656 = vld [vmem:[%s5 + $0xc] sm:$0xf]
    %v657 = vld [vmem:[%s6] sm:$0x1]
    %v659 = vlaneseq
    %v660 = vshrl.u32 %v659, 7
    %v661 = vsub.s32 0, %v660
    %v662 = vrot.slane %v657, %v661
    %v668 = vunpack.c.l.b16 %v653
    %v669 = vunpack.c.l.b16 %v654
    %v670 = vunpack.c.l.b16 %v655
    %v671 = vunpack.c.l.b16 %v656
    %v672 = vpack.c.b16 %v669, %v668
    %v673 = vpack.c.b16 %v671, %v670
    %v677 = vsel %vm37, %v652, 0
    %679 = vmatprep.subr.bf16.mxu0 0
    %680 = vmatpush1.bf16.msra.mxu0 %v672
    %681 = vmatprep.subr.bf16.mxu0 0
    %682 = vmatpush1.bf16.msra.mxu0 %v673
    %683 = vmatprep.subr.bf16.mxu0 0
    %684 = vmatpush1.bf16.msra.mxu0 0
    %685 = vmatprep.subr.bf16.mxu0 0
    %686 = vmatpush1.bf16.msra.mxu0 0
    %687 = vmatprep.subr.bf16.mxu0 0
    %688 = vmatpush1.bf16.msra.mxu0 0
    %689 = vmatprep.subr.bf16.mxu0 0
    %690 = vmatpush1.bf16.msra.mxu0 0
    %691 = vmatprep.subr.bf16.mxu0 0
    %692 = vmatpush1.bf16.msra.mxu0 0
    %693 = vmatprep.subr.bf16.mxu0 0
    %694 = vmatpush1.bf16.msra.mxu0 0
    %695 = vmatprep.subr.bf16.mxu0 0
    %696 = vmatpush1.bf16.msra.mxu0 0
    %697 = vmatprep.subr.bf16.mxu0 0
    %698 = vmatpush1.bf16.msra.mxu0 0
    %699 = vmatprep.subr.bf16.mxu0 0
    %700 = vmatpush1.bf16.msra.mxu0 0
    %701 = vmatprep.subr.bf16.mxu0 0
    %702 = vmatpush1.bf16.msra.mxu0 0
    %703 = vmatprep.subr.bf16.mxu0 0
    %704 = vmatpush1.bf16.msra.mxu0 0
    %705 = vmatprep.subr.bf16.mxu0 0
    %706 = vmatpush1.bf16.msra.mxu0 0
    %707 = vmatprep.subr.bf16.mxu0 0
    %708 = vmatpush1.bf16.msra.mxu0 0
    %709 = vmatprep.subr.bf16.mxu0 0
    %710 = vmatpush1.bf16.msra.mxu0 0
    %711 = vmatprep.mubr.bf16.mxu0 0
    %712 = vmatmul.mubr.bf16.gmra.mrb[0].mxu0 %v677
    %v713 = vpop.f32.mrb[0].mxu0
    %v714 = vadd.f32 %v662, %v713
    %v715 = vpop.f32.mrb[0].mxu0
    %v716 = vpop.f32.mrb[0].mxu0
    %v717 = vadd.f32 %v662, %v716
    %v718 = vpop.f32.mrb[0].mxu0
    %719 = vdwg.mxu0
    %v720 = vmul.f32 %v714, 0.5
    %v721 = vmul.f32 %v717, 0.5
    %v722 = vmul.f32 %v714, 0.044715
    %v723 = vmul.f32 %v717, 0.044715
    %v724 = vmul.f32 %v722, %v714
    %v725 = vmul.f32 %v723, %v717
    %v726 = vmul.f32 %v724, %v714
    %v727 = vmul.f32 %v725, %v717
    %v728 = vadd.f32 %v714, %v726
    %v729 = vadd.f32 %v717, %v727
    %v730 = vmul.f32 %v728, 0.7978846
    %v731 = vmul.f32 %v729, 0.7978846
    %v732 = vtanh.pop %v730
    %v733 = vtanh.pop %v731
    %v734 = vadd.f32 %v732, 1.0
    %v735 = vadd.f32 %v733, 1.0
    %v736 = vmul.f32 %v720, %v734
    %v737 = vmul.f32 %v721, %v735
    %v738 = vpack.c.bf16 %v737, %v736
    %v739 = vld [vmem:[%s7] sm:$0xf]
    %v740 = vld [vmem:[%s7 + $0x4] sm:$0xf]
    %v741 = vld [vmem:[%s7 + $0x8] sm:$0xf]
    %v742 = vld [vmem:[%s7 + $0xc] sm:$0xf]
    %v743 = vld [vmem:[%s7 + $0x10] sm:$0xf]
    %v744 = vld [vmem:[%s7 + $0x14] sm:$0xf]
    %v745 = vld [vmem:[%s7 + $0x18] sm:$0xf]
    %v746 = vld [vmem:[%s7 + $0x1c] sm:$0xf]
    %v747 = vld [vmem:[%s7 + $0x20] sm:$0xf]
    %v748 = vld [vmem:[%s7 + $0x24] sm:$0xf]
    %v749 = vld [vmem:[%s7 + $0x28] sm:$0xf]
    %v750 = vld [vmem:[%s7 + $0x2c] sm:$0xf]
    %v751 = vld [vmem:[%s7 + $0x30] sm:$0xf]
    %v752 = vld [vmem:[%s7 + $0x34] sm:$0xf]
    %v753 = vld [vmem:[%s7 + $0x38] sm:$0xf]
    %v754 = vld [vmem:[%s7 + $0x3c] sm:$0xf]
    %v755 = vlaneseq
    %v756 = vshrl.u32 %v755, 7
    %v757 = vsub.s32 6, %v756
    %v758 = vrot.slane %v87, %v757
    %v775 = vunpack.c.l.b16 %v739
    %v776 = vunpack.c.l.b16 %v740
    %v777 = vunpack.c.l.b16 %v741
    %v778 = vunpack.c.l.b16 %v742
    %v779 = vunpack.c.l.b16 %v743
    %v780 = vunpack.c.l.b16 %v744
    %v781 = vunpack.c.l.b16 %v745
    %v782 = vunpack.c.l.b16 %v746
    %v783 = vunpack.c.l.b16 %v747
    %v784 = vunpack.c.l.b16 %v748
    %v785 = vunpack.c.l.b16 %v749
    %v786 = vunpack.c.l.b16 %v750
    %v787 = vunpack.c.l.b16 %v751
    %v788 = vunpack.c.l.b16 %v752
    %v789 = vunpack.c.l.b16 %v753
    %v790 = vunpack.c.l.b16 %v754
    %v791 = vpack.c.b16 %v776, %v775
    %v792 = vpack.c.b16 %v778, %v777
    %v793 = vpack.c.b16 %v780, %v779
    %v794 = vpack.c.b16 %v782, %v781
    %v795 = vpack.c.b16 %v784, %v783
    %v796 = vpack.c.b16 %v786, %v785
    %v797 = vpack.c.b16 %v788, %v787
    %v798 = vpack.c.b16 %v790, %v789
    %807 = vmatprep.subr.bf16.mxu0 0
    %808 = vmatpush1.bf16.msra.mxu0 %v791
    %809 = vmatprep.subr.bf16.mxu0 0
    %810 = vmatpush1.bf16.msra.mxu0 %v792
    %811 = vmatprep.subr.bf16.mxu0 0
    %812 = vmatpush1.bf16.msra.mxu0 %v793
    %813 = vmatprep.subr.bf16.mxu0 0
    %814 = vmatpush1.bf16.msra.mxu0 %v794
    %815 = vmatprep.subr.bf16.mxu0 0
    %816 = vmatpush1.bf16.msra.mxu0 %v795
    %817 = vmatprep.subr.bf16.mxu0 0
    %818 = vmatpush1.bf16.msra.mxu0 %v796
    %819 = vmatprep.subr.bf16.mxu0 0
    %820 = vmatpush1.bf16.msra.mxu0 %v797
    %821 = vmatprep.subr.bf16.mxu0 0
    %822 = vmatpush1.bf16.msra.mxu0 %v798
    %823 = vmatprep.subr.bf16.mxu0 0
    %824 = vmatpush1.bf16.msra.mxu0 0
    %825 = vmatprep.subr.bf16.mxu0 0
    %826 = vmatpush1.bf16.msra.mxu0 0
    %827 = vmatprep.subr.bf16.mxu0 0
    %828 = vmatpush1.bf16.msra.mxu0 0
    %829 = vmatprep.subr.bf16.mxu0 0
    %830 = vmatpush1.bf16.msra.mxu0 0
    %831 = vmatprep.subr.bf16.mxu0 0
    %832 = vmatpush1.bf16.msra.mxu0 0
    %833 = vmatprep.subr.bf16.mxu0 0
    %834 = vmatpush1.bf16.msra.mxu0 0
    %835 = vmatprep.subr.bf16.mxu0 0
    %836 = vmatpush1.bf16.msra.mxu0 0
    %837 = vmatprep.subr.bf16.mxu0 0
    %838 = vmatpush1.bf16.msra.mxu0 0
    %839 = vmatprep.mubr.bf16.mxu0 0
    %840 = vmatmul.mubr.bf16.gmra.mrb[0].mxu0 %v738
    %v841 = vpop.f32.mrb[0].mxu0
    %v842 = vadd.f32 %v758, %v841
    %v843 = vpop.f32.mrb[0].mxu0
    %v844 = vpop.f32.mrb[0].mxu0
    %v845 = vadd.f32 %v758, %v844
    %v846 = vpop.f32.mrb[0].mxu0
    %847 = vdwg.mxu0
    %v848 = vadd.f32 %v650, %v842
    %v849 = vadd.f32 %v651, %v845
    %v850 = vsel %vm37, %v848, 0.0
    %851 = vadd.xlane.f32.xlu0 %v850
    %v852 = vpop.xlane.xlu0 %851
    %v853 = vsel %vm37, %v849, 0.0
    %854 = vadd.xlane.f32.xlu0 %v853
    %v855 = vpop.xlane.xlu0 %854
    %v856 = vmul.f32 %v852, 0.03125
    %v857 = vmul.f32 %v855, 0.03125
    %v858 = vmul.f32 %v848, %v848
    %v859 = vmul.f32 %v849, %v849
    %v860 = vsel %vm37, %v858, 0.0
    %861 = vadd.xlane.f32.xlu0 %v860
    %v862 = vpop.xlane.xlu0 %861
    %v863 = vsel %vm37, %v859, 0.0
    %864 = vadd.xlane.f32.xlu0 %v863
    %v865 = vpop.xlane.xlu0 %864
    %v866 = vmul.f32 %v862, 0.03125
    %v867 = vmul.f32 %v865, 0.03125
    %v868 = vmul.f32 %v856, %v856
    %v869 = vmul.f32 %v857, %v857
    %v870 = vsub.f32 %v866, %v868
    %v871 = vsub.f32 %v867, %v869
    %v872 = vmax.f32 %v870, 0.0
    %v873 = vmax.f32 %v871, 0.0
    %v874 = vsub.f32 %v848, %v856
    %v875 = vsub.f32 %v849, %v857
    %v876 = vadd.f32 %v872, 1e-12
    %v877 = vadd.f32 %v873, 1e-12
    %v878 = vrsqrt.pop %v876
    %v879 = vrsqrt.pop %v877
    %v880 = vmul.f32 %v874, %v878
    %v881 = vmul.f32 %v875, %v879
    %v882 = vlaneseq
    %v883 = vshrl.u32 %v882, 7
    %v884 = vsub.s32 7, %v883
    %v885 = vrot.slane %v87, %v884
    %v886 = vmul.f32 %v880, %v885
    %v887 = vmul.f32 %v881, %v885
    %v888 = vlaneseq
    %v889 = vshrl.u32 %v888, 7
    %v890 = vsub.s32 0, %v889
    %v891 = vrot.slane %v88, %v890
    %v892 = vadd.f32 %v886, %v891
    %v893 = vadd.f32 %v887, %v891
    %s894 = scalar_lea.vmem %s8, 16
    %v895 = vld [vmem:[%s894] sm:$0xff]
    %v896 = vld [vmem:[%s894 + $0x8] sm:$0x1]
    %v897 = vpack.c.bf16 %v893, %v892
    %s898 = scalar_lea.vmem %s4, 64
    %v899 = vld [vmem:[%s898] sm:$0xf]
    %v900 = vld [vmem:[%s898 + $0x4] sm:$0xf]
    %v901 = vld [vmem:[%s898 + $0x8] sm:$0xf]
    %v902 = vld [vmem:[%s898 + $0xc] sm:$0xf]
    %v903 = vlaneseq
    %v904 = vshrl.u32 %v903, 7
    %v905 = vsub.s32 0, %v904
    %v906 = vrot.slane %v895, %v905
    %v911 = vunpack.c.l.b16 %v899
    %v912 = vunpack.c.l.b16 %v900
    %v913 = vunpack.c.l.b16 %v901
    %v914 = vunpack.c.l.b16 %v902
    %v915 = vpack.c.b16 %v912, %v911
    %v916 = vpack.c.b16 %v914, %v913
    %v920 = vsel %vm37, %v897, 0
    %922 = vmatprep.subr.bf16.mxu0 0
    %923 = vmatpush1.bf16.msra.mxu0 %v915
    %924 = vmatprep.subr.bf16.mxu0 0
    %925 = vmatpush1.bf16.msra.mxu0 %v916
    %926 = vmatprep.subr.bf16.mxu0 0
    %927 = vmatpush1.bf16.msra.mxu0 0
    %928 = vmatprep.subr.bf16.mxu0 0
    %929 = vmatpush1.bf16.msra.mxu0 0
    %930 = vmatprep.subr.bf16.mxu0 0
    %931 = vmatpush1.bf16.msra.mxu0 0
    %932 = vmatprep.subr.bf16.mxu0 0
    %933 = vmatpush1.bf16.msra.mxu0 0
    %934 = vmatprep.subr.bf16.mxu0 0
    %935 = vmatpush1.bf16.msra.mxu0 0
    %936 = vmatprep.subr.bf16.mxu0 0
    %937 = vmatpush1.bf16.msra.mxu0 0
    %938 = vmatprep.subr.bf16.mxu0 0
    %939 = vmatpush1.bf16.msra.mxu0 0
    %940 = vmatprep.subr.bf16.mxu0 0
    %941 = vmatpush1.bf16.msra.mxu0 0
    %942 = vmatprep.subr.bf16.mxu0 0
    %943 = vmatpush1.bf16.msra.mxu0 0
    %944 = vmatprep.subr.bf16.mxu0 0
    %945 = vmatpush1.bf16.msra.mxu0 0
    %946 = vmatprep.subr.bf16.mxu0 0
    %947 = vmatpush1.bf16.msra.mxu0 0
    %948 = vmatprep.subr.bf16.mxu0 0
    %949 = vmatpush1.bf16.msra.mxu0 0
    %950 = vmatprep.subr.bf16.mxu0 0
    %951 = vmatpush1.bf16.msra.mxu0 0
    %952 = vmatprep.subr.bf16.mxu0 0
    %953 = vmatpush1.bf16.msra.mxu0 0
    %954 = vmatprep.mubr.bf16.mxu0 0
    %955 = vmatmul.mubr.bf16.gmra.mrb[0].mxu0 %v920
    %v956 = vpop.f32.mrb[0].mxu0
    %v957 = vadd.f32 %v906, %v956
    %v958 = vpop.f32.mrb[0].mxu0
    %v959 = vpop.f32.mrb[0].mxu0
    %v960 = vadd.f32 %v906, %v959
    %v961 = vpop.f32.mrb[0].mxu0
    %962 = vdwg.mxu0
    %s963 = scalar_lea.vmem %s4, 80
    %v964 = vld [vmem:[%s963] sm:$0xf]
    %v965 = vld [vmem:[%s963 + $0x4] sm:$0xf]
    %v966 = vld [vmem:[%s963 + $0x8] sm:$0xf]
    %v967 = vld [vmem:[%s963 + $0xc] sm:$0xf]
    %v968 = vlaneseq
    %v969 = vshrl.u32 %v968, 7
    %v970 = vsub.s32 1, %v969
    %v971 = vrot.slane %v895, %v970
    %v976 = vunpack.c.l.b16 %v964
    %v977 = vunpack.c.l.b16 %v965
    %v978 = vunpack.c.l.b16 %v966
    %v979 = vunpack.c.l.b16 %v967
    %v980 = vpack.c.b16 %v977, %v976
    %v981 = vpack.c.b16 %v979, %v978
    %984 = vmatprep.subr.bf16.mxu0 0
    %985 = vmatpush1.bf16.msra.mxu0 %v980
    %986 = vmatprep.subr.bf16.mxu0 0
    %987 = vmatpush1.bf16.msra.mxu0 %v981
    %988 = vmatprep.subr.bf16.mxu0 0
    %989 = vmatpush1.bf16.msra.mxu0 0
    %990 = vmatprep.subr.bf16.mxu0 0
    %991 = vmatpush1.bf16.msra.mxu0 0
    %992 = vmatprep.subr.bf16.mxu0 0
    %993 = vmatpush1.bf16.msra.mxu0 0
    %994 = vmatprep.subr.bf16.mxu0 0
    %995 = vmatpush1.bf16.msra.mxu0 0
    %996 = vmatprep.subr.bf16.mxu0 0
    %997 = vmatpush1.bf16.msra.mxu0 0
    %998 = vmatprep.subr.bf16.mxu0 0
    %999 = vmatpush1.bf16.msra.mxu0 0
    %1000 = vmatprep.subr.bf16.mxu0 0
    %1001 = vmatpush1.bf16.msra.mxu0 0
    %1002 = vmatprep.subr.bf16.mxu0 0
    %1003 = vmatpush1.bf16.msra.mxu0 0
    %1004 = vmatprep.subr.bf16.mxu0 0
    %1005 = vmatpush1.bf16.msra.mxu0 0
    %1006 = vmatprep.subr.bf16.mxu0 0
    %1007 = vmatpush1.bf16.msra.mxu0 0
    %1008 = vmatprep.subr.bf16.mxu0 0
    %1009 = vmatpush1.bf16.msra.mxu0 0
    %1010 = vmatprep.subr.bf16.mxu0 0
    %1011 = vmatpush1.bf16.msra.mxu0 0
    %1012 = vmatprep.subr.bf16.mxu0 0
    %1013 = vmatpush1.bf16.msra.mxu0 0
    %1014 = vmatprep.subr.bf16.mxu0 0
    %1015 = vmatpush1.bf16.msra.mxu0 0
    %1016 = vmatprep.mubr.bf16.mxu0 0
    %1017 = vmatmul.mubr.bf16.gmra.mrb[0].mxu0 %v920
    %v1018 = vpop.f32.mrb[0].mxu0
    %v1019 = vadd.f32 %v971, %v1018
    %v1020 = vpop.f32.mrb[0].mxu0
    %v1021 = vpop.f32.mrb[0].mxu0
    %v1022 = vadd.f32 %v971, %v1021
    %v1023 = vpop.f32.mrb[0].mxu0
    %1024 = vdwg.mxu0
    %s1025 = scalar_lea.vmem %s4, 96
    %v1026 = vld [vmem:[%s1025] sm:$0xf]
    %v1027 = vld [vmem:[%s1025 + $0x4] sm:$0xf]
    %v1028 = vld [vmem:[%s1025 + $0x8] sm:$0xf]
    %v1029 = vld [vmem:[%s1025 + $0xc] sm:$0xf]
    %v1030 = vlaneseq
    %v1031 = vshrl.u32 %v1030, 7
    %v1032 = vsub.s32 2, %v1031
    %v1033 = vrot.slane %v895, %v1032
    %v1038 = vunpack.c.l.b16 %v1026
    %v1039 = vunpack.c.l.b16 %v1027
    %v1040 = vunpack.c.l.b16 %v1028
    %v1041 = vunpack.c.l.b16 %v1029
    %v1042 = vpack.c.b16 %v1039, %v1038
    %v1043 = vpack.c.b16 %v1041, %v1040
    %1046 = vmatprep.subr.bf16.mxu0 0
    %1047 = vmatpush1.bf16.msra.mxu0 %v1042
    %1048 = vmatprep.subr.bf16.mxu0 0
    %1049 = vmatpush1.bf16.msra.mxu0 %v1043
    %1050 = vmatprep.subr.bf16.mxu0 0
    %1051 = vmatpush1.bf16.msra.mxu0 0
    %1052 = vmatprep.subr.bf16.mxu0 0
    %1053 = vmatpush1.bf16.msra.mxu0 0
    %1054 = vmatprep.subr.bf16.mxu0 0
    %1055 = vmatpush1.bf16.msra.mxu0 0
    %1056 = vmatprep.subr.bf16.mxu0 0
    %1057 = vmatpush1.bf16.msra.mxu0 0
    %1058 = vmatprep.subr.bf16.mxu0 0
    %1059 = vmatpush1.bf16.msra.mxu0 0
    %1060 = vmatprep.subr.bf16.mxu0 0
    %1061 = vmatpush1.bf16.msra.mxu0 0
    %1062 = vmatprep.subr.bf16.mxu0 0
    %1063 = vmatpush1.bf16.msra.mxu0 0
    %1064 = vmatprep.subr.bf16.mxu0 0
    %1065 = vmatpush1.bf16.msra.mxu0 0
    %1066 = vmatprep.subr.bf16.mxu0 0
    %1067 = vmatpush1.bf16.msra.mxu0 0
    %1068 = vmatprep.subr.bf16.mxu0 0
    %1069 = vmatpush1.bf16.msra.mxu0 0
    %1070 = vmatprep.subr.bf16.mxu0 0
    %1071 = vmatpush1.bf16.msra.mxu0 0
    %1072 = vmatprep.subr.bf16.mxu0 0
    %1073 = vmatpush1.bf16.msra.mxu0 0
    %1074 = vmatprep.subr.bf16.mxu0 0
    %1075 = vmatpush1.bf16.msra.mxu0 0
    %1076 = vmatprep.subr.bf16.mxu0 0
    %1077 = vmatpush1.bf16.msra.mxu0 0
    %1078 = vmatprep.mubr.bf16.mxu0 0
    %1079 = vmatmul.mubr.bf16.gmra.mrb[0].mxu0 %v920
    %v1080 = vpop.f32.mrb[0].mxu0
    %v1081 = vadd.f32 %v1033, %v1080
    %v1082 = vpop.f32.mrb[0].mxu0
    %v1083 = vpop.f32.mrb[0].mxu0
    %v1084 = vadd.f32 %v1033, %v1083
    %v1085 = vpop.f32.mrb[0].mxu0
    %1086 = vdwg.mxu0
    %v1087 = vmul.f32 %v1019, %v281
    %v1088 = vmul.f32 %v1022, %v281
    %v1089 = vmul.f32 %v1019, %v287
    %v1090 = vmul.f32 %v1022, %v287
    %v1091 = vmul.f32 %v1081, %v281
    %v1092 = vmul.f32 %v1084, %v281
    %v1093 = vmul.f32 %v1081, %v287
    %v1094 = vmul.f32 %v1084, %v287
    %v1096 = vsel %vm37, %v957, 0
    %v1099 = vsel %vm37, %v960, 0
    %v1102 = vsel %vm37, %v1087, 0
    %v1105 = vsel %vm37, %v1088, 0
    %v1108 = vsel %vm37, %v1089, 0
    %v1111 = vsel %vm37, %v1090, 0
    %1113 = vmatprep.subr.mxu0 0.0
    %1114 = vmatpush1.xpose.msra.mxu0 %v1102
    %1115 = vmatprep.subr.mxu0 0.0
    %1116 = vmatpush1.xpose.msra.mxu0 %v1105
    %1117 = vmatprep.subr.mxu0 0.0
    %1118 = vmatpush1.xpose.msra.mxu0 %v1108
    %1119 = vmatprep.subr.mxu0 0.0
    %1120 = vmatpush1.xpose.msra.mxu0 %v1111
    %1121 = vmatprep.subr.mxu0 0.0
    %1122 = vmatpush1.xpose.msra.mxu0 0.0
    %1123 = vmatprep.subr.mxu0 0.0
    %1124 = vmatpush1.xpose.msra.mxu0 0.0
    %1125 = vmatprep.subr.mxu0 0.0
    %1126 = vmatpush1.xpose.msra.mxu0 0.0
    %1127 = vmatprep.subr.mxu0 0.0
    %1128 = vmatpush1.xpose.msra.mxu0 0.0
    %1129 = vmatprep.subr.mxu0 0.0
    %1130 = vmatpush1.xpose.msra.mxu0 0.0
    %1131 = vmatprep.subr.mxu0 0.0
    %1132 = vmatpush1.xpose.msra.mxu0 0.0
    %1133 = vmatprep.subr.mxu0 0.0
    %1134 = vmatpush1.xpose.msra.mxu0 0.0
    %1135 = vmatprep.subr.mxu0 0.0
    %1136 = vmatpush1.xpose.msra.mxu0 0.0
    %1137 = vmatprep.subr.mxu0 0.0
    %1138 = vmatpush1.xpose.msra.mxu0 0.0
    %1139 = vmatprep.subr.mxu0 0.0
    %1140 = vmatpush1.xpose.msra.mxu0 0.0
    %1141 = vmatprep.subr.mxu0 0.0
    %1142 = vmatpush1.xpose.msra.mxu0 0.0
    %1143 = vmatprep.subr.mxu0 0.0
    %1144 = vmatpush1.xpose.msra.mxu0 0.0
    %1145 = vmatprep.subr.mxu0 0.0
    %1146 = vmatpush1.xpose.msra.mxu0 0.0
    %1147 = vmatprep.subr.mxu0 0.0
    %1148 = vmatpush1.xpose.msra.mxu0 0.0
    %1149 = vmatprep.subr.mxu0 0.0
    %1150 = vmatpush1.xpose.msra.mxu0 0.0
    %1151 = vmatprep.subr.mxu0 0.0
    %1152 = vmatpush1.xpose.msra.mxu0 0.0
    %1153 = vmatprep.subr.mxu0 0.0
    %1154 = vmatpush1.xpose.msra.mxu0 0.0
    %1155 = vmatprep.subr.mxu0 0.0
    %1156 = vmatpush1.xpose.msra.mxu0 0.0
    %1157 = vmatprep.subr.mxu0 0.0
    %1158 = vmatpush1.xpose.msra.mxu0 0.0
    %1159 = vmatprep.subr.mxu0 0.0
    %1160 = vmatpush1.xpose.msra.mxu0 0.0
    %1161 = vmatprep.subr.mxu0 0.0
    %1162 = vmatpush1.xpose.msra.mxu0 0.0
    %1163 = vmatprep.subr.mxu0 0.0
    %1164 = vmatpush1.xpose.msra.mxu0 0.0
    %1165 = vmatprep.subr.mxu0 0.0
    %1166 = vmatpush1.xpose.msra.mxu0 0.0
    %1167 = vmatprep.subr.mxu0 0.0
    %1168 = vmatpush1.xpose.msra.mxu0 0.0
    %1169 = vmatprep.subr.mxu0 0.0
    %1170 = vmatpush1.xpose.msra.mxu0 0.0
    %1171 = vmatprep.subr.mxu0 0.0
    %1172 = vmatpush1.xpose.msra.mxu0 0.0
    %1173 = vmatprep.subr.mxu0 0.0
    %1174 = vmatpush1.xpose.msra.mxu0 0.0
    %1175 = vmatprep.subr.mxu0 0.0
    %1176 = vmatpush1.xpose.msra.mxu0 0.0
    %1177 = vmatprep.mubr.f32.mxu0 0.0
    %1178 = vmatmul.mubr.f32.gmra.mrb[0].mxu0 %v1096
    %v1179 = vpop.f32.mrb[0].mxu0
    %v1180 = vadd.f32 %v82, %v1179
    %v1181 = vpop.f32.mrb[0].mxu0
    %1182 = vmatprep.mubr.f32.mxu0 0.0
    %1183 = vmatmul.mubr.f32.gmra.mrb[0].mxu0 %v1099
    %v1184 = vpop.f32.mrb[0].mxu0
    %v1185 = vadd.f32 %v83, %v1184
    %v1186 = vpop.f32.mrb[0].mxu0
    %1187 = vmatprep.mubr.f32.mxu0 0.0
    %1188 = vmatmul.mubr.f32.gmra.mrb[0].mxu0 %v1096
    %v1189 = vpop.f32.mrb[0].mxu0
    %v1190 = vadd.f32 %v84, %v1189
    %v1191 = vpop.f32.mrb[0].mxu0
    %1192 = vmatprep.mubr.f32.mxu0 0.0
    %1193 = vmatmul.mubr.f32.gmra.mrb[0].mxu0 %v1099
    %v1194 = vpop.f32.mrb[0].mxu0
    %v1195 = vadd.f32 %v85, %v1194
    %v1196 = vpop.f32.mrb[0].mxu0
    %1197 = vdwg.mxu0
    %v1198 = vsel %vm37, %v1180, -inf
    %1199 = vmax.xlane.f32.xlu0 %v1198
    %v1200 = vpop.xlane.xlu0 %1199
    %v1201 = vsel %vm37, %v1185, -inf
    %1202 = vmax.xlane.f32.xlu0 %v1201
    %v1203 = vpop.xlane.xlu0 %1202
    %v1204 = vsel %vm37, %v1190, -inf
    %1205 = vmax.xlane.f32.xlu0 %v1204
    %v1206 = vpop.xlane.xlu0 %1205
    %v1207 = vsel %vm37, %v1195, -inf
    %1208 = vmax.xlane.f32.xlu0 %v1207
    %v1209 = vpop.xlane.xlu0 %1208
    %v1210 = vsub.f32 %v1180, %v1200
    %v1211 = vsub.f32 %v1185, %v1203
    %v1212 = vsub.f32 %v1190, %v1206
    %v1213 = vsub.f32 %v1195, %v1209
    %v1214 = vmul.f32 %v1210, 1.442695
    %v1215 = vpow.pop %v1214
    %v1216 = vmul.f32 %v1211, 1.442695
    %v1217 = vpow.pop %v1216
    %v1218 = vmul.f32 %v1212, 1.442695
    %v1219 = vpow.pop %v1218
    %v1220 = vmul.f32 %v1213, 1.442695
    %v1221 = vpow.pop %v1220
    %v1222 = vsel %vm37, %v1215, 0.0
    %1223 = vadd.xlane.f32.xlu0 %v1222
    %v1224 = vpop.xlane.xlu0 %1223
    %v1225 = vsel %vm37, %v1217, 0.0
    %1226 = vadd.xlane.f32.xlu0 %v1225
    %v1227 = vpop.xlane.xlu0 %1226
    %v1228 = vsel %vm37, %v1219, 0.0
    %1229 = vadd.xlane.f32.xlu0 %v1228
    %v1230 = vpop.xlane.xlu0 %1229
    %v1231 = vsel %vm37, %v1221, 0.0
    %1232 = vadd.xlane.f32.xlu0 %v1231
    %v1233 = vpop.xlane.xlu0 %1232
    %v1234 = vrcp.pop %v1224
    %v1235 = vrcp.pop %v1227
    %v1236 = vrcp.pop %v1230
    %v1237 = vrcp.pop %v1233
    %v1238 = vmul.f32 %v1215, %v1234
    %v1239 = vmul.f32 %v1217, %v1235
    %v1240 = vmul.f32 %v1219, %v1236
    %v1241 = vmul.f32 %v1221, %v1237
    %v1243 = vsel %vm37, %v1238, 0
    %v1246 = vsel %vm37, %v1239, 0
    %v1249 = vsel %vm37, %v1240, 0
    %v1252 = vsel %vm37, %v1241, 0
    %1254 = vmatprep.subr.mxu0 0.0
    %1255 = vmatpush1.msra.mxu0 %v1091
    %1256 = vmatprep.subr.mxu0 0.0
    %1257 = vmatpush1.msra.mxu0 %v1092
    %1258 = vmatprep.subr.mxu0 0.0
    %1259 = vmatpush1.msra.mxu0 %v1093
    %1260 = vmatprep.subr.mxu0 0.0
    %1261 = vmatpush1.msra.mxu0 %v1094
    %1262 = vmatprep.subr.mxu0 0.0
    %1263 = vmatpush1.msra.mxu0 0.0
    %1264 = vmatprep.subr.mxu0 0.0
    %1265 = vmatpush1.msra.mxu0 0.0
    %1266 = vmatprep.subr.mxu0 0.0
    %1267 = vmatpush1.msra.mxu0 0.0
    %1268 = vmatprep.subr.mxu0 0.0
    %1269 = vmatpush1.msra.mxu0 0.0
    %1270 = vmatprep.subr.mxu0 0.0
    %1271 = vmatpush1.msra.mxu0 0.0
    %1272 = vmatprep.subr.mxu0 0.0
    %1273 = vmatpush1.msra.mxu0 0.0
    %1274 = vmatprep.subr.mxu0 0.0
    %1275 = vmatpush1.msra.mxu0 0.0
    %1276 = vmatprep.subr.mxu0 0.0
    %1277 = vmatpush1.msra.mxu0 0.0
    %1278 = vmatprep.subr.mxu0 0.0
    %1279 = vmatpush1.msra.mxu0 0.0
    %1280 = vmatprep.subr.mxu0 0.0
    %1281 = vmatpush1.msra.mxu0 0.0
    %1282 = vmatprep.subr.mxu0 0.0
    %1283 = vmatpush1.msra.mxu0 0.0
    %1284 = vmatprep.subr.mxu0 0.0
    %1285 = vmatpush1.msra.mxu0 0.0
    %1286 = vmatprep.subr.mxu0 0.0
    %1287 = vmatpush1.msra.mxu0 0.0
    %1288 = vmatprep.subr.mxu0 0.0
    %1289 = vmatpush1.msra.mxu0 0.0
    %1290 = vmatprep.subr.mxu0 0.0
    %1291 = vmatpush1.msra.mxu0 0.0
    %1292 = vmatprep.subr.mxu0 0.0
    %1293 = vmatpush1.msra.mxu0 0.0
    %1294 = vmatprep.subr.mxu0 0.0
    %1295 = vmatpush1.msra.mxu0 0.0
    %1296 = vmatprep.subr.mxu0 0.0
    %1297 = vmatpush1.msra.mxu0 0.0
    %1298 = vmatprep.subr.mxu0 0.0
    %1299 = vmatpush1.msra.mxu0 0.0
    %1300 = vmatprep.subr.mxu0 0.0
    %1301 = vmatpush1.msra.mxu0 0.0
    %1302 = vmatprep.subr.mxu0 0.0
    %1303 = vmatpush1.msra.mxu0 0.0
    %1304 = vmatprep.subr.mxu0 0.0
    %1305 = vmatpush1.msra.mxu0 0.0
    %1306 = vmatprep.subr.mxu0 0.0
    %1307 = vmatpush1.msra.mxu0 0.0
    %1308 = vmatprep.subr.mxu0 0.0
    %1309 = vmatpush1.msra.mxu0 0.0
    %1310 = vmatprep.subr.mxu0 0.0
    %1311 = vmatpush1.msra.mxu0 0.0
    %1312 = vmatprep.subr.mxu0 0.0
    %1313 = vmatpush1.msra.mxu0 0.0
    %1314 = vmatprep.subr.mxu0 0.0
    %1315 = vmatpush1.msra.mxu0 0.0
    %1316 = vmatprep.subr.mxu0 0.0
    %1317 = vmatpush1.msra.mxu0 0.0
    %1318 = vmatprep.mubr.f32.mxu0 0.0
    %1319 = vmatmul.mubr.f32.gmra.mrb[0].mxu0 %v1243
    %v1320 = vpop.f32.mrb[0].mxu0
    %v1321 = vadd.f32 0.0, %v1320
    %v1322 = vpop.f32.mrb[0].mxu0
    %1323 = vmatprep.mubr.f32.mxu0 0.0
    %1324 = vmatmul.mubr.f32.gmra.mrb[0].mxu0 %v1246
    %v1325 = vpop.f32.mrb[0].mxu0
    %v1326 = vadd.f32 0.0, %v1325
    %v1327 = vpop.f32.mrb[0].mxu0
    %1328 = vmatprep.mubr.f32.mxu0 0.0
    %1329 = vmatmul.mubr.f32.gmra.mrb[0].mxu0 %v1249
    %v1330 = vpop.f32.mrb[0].mxu0
    %v1331 = vadd.f32 0.0, %v1330
    %v1332 = vpop.f32.mrb[0].mxu0
    %1333 = vmatprep.mubr.f32.mxu0 0.0
    %1334 = vmatmul.mubr.f32.gmra.mrb[0].mxu0 %v1252
    %v1335 = vpop.f32.mrb[0].mxu0
    %v1336 = vadd.f32 0.0, %v1335
    %v1337 = vpop.f32.mrb[0].mxu0
    %1338 = vdwg.mxu0
    %v1339 = vadd.f32 %v1321, %v1331
    %v1340 = vadd.f32 %v1326, %v1336
    %v1341 = vpack.c.bf16 %v1340, %v1339
    %s1342 = scalar_lea.vmem %s4, 112
    %v1343 = vld [vmem:[%s1342] sm:$0xf]
    %v1344 = vld [vmem:[%s1342 + $0x4] sm:$0xf]
    %v1345 = vld [vmem:[%s1342 + $0x8] sm:$0xf]
    %v1346 = vld [vmem:[%s1342 + $0xc] sm:$0xf]
    %v1347 = vlaneseq
    %v1348 = vshrl.u32 %v1347, 7
    %v1349 = vsub.s32 3, %v1348
    %v1350 = vrot.slane %v895, %v1349
    %v1355 = vunpack.c.l.b16 %v1343
    %v1356 = vunpack.c.l.b16 %v1344
    %v1357 = vunpack.c.l.b16 %v1345
    %v1358 = vunpack.c.l.b16 %v1346
    %v1359 = vpack.c.b16 %v1356, %v1355
    %v1360 = vpack.c.b16 %v1358, %v1357
    %v1364 = vsel %vm37, %v1341, 0
    %1366 = vmatprep.subr.bf16.mxu0 0
    %1367 = vmatpush1.bf16.msra.mxu0 %v1359
    %1368 = vmatprep.subr.bf16.mxu0 0
    %1369 = vmatpush1.bf16.msra.mxu0 %v1360
    %1370 = vmatprep.subr.bf16.mxu0 0
    %1371 = vmatpush1.bf16.msra.mxu0 0
    %1372 = vmatprep.subr.bf16.mxu0 0
    %1373 = vmatpush1.bf16.msra.mxu0 0
    %1374 = vmatprep.subr.bf16.mxu0 0
    %1375 = vmatpush1.bf16.msra.mxu0 0
    %1376 = vmatprep.subr.bf16.mxu0 0
    %1377 = vmatpush1.bf16.msra.mxu0 0
    %1378 = vmatprep.subr.bf16.mxu0 0
    %1379 = vmatpush1.bf16.msra.mxu0 0
    %1380 = vmatprep.subr.bf16.mxu0 0
    %1381 = vmatpush1.bf16.msra.mxu0 0
    %1382 = vmatprep.subr.bf16.mxu0 0
    %1383 = vmatpush1.bf16.msra.mxu0 0
    %1384 = vmatprep.subr.bf16.mxu0 0
    %1385 = vmatpush1.bf16.msra.mxu0 0
    %1386 = vmatprep.subr.bf16.mxu0 0
    %1387 = vmatpush1.bf16.msra.mxu0 0
    %1388 = vmatprep.subr.bf16.mxu0 0
    %1389 = vmatpush1.bf16.msra.mxu0 0
    %1390 = vmatprep.subr.bf16.mxu0 0
    %1391 = vmatpush1.bf16.msra.mxu0 0
    %1392 = vmatprep.subr.bf16.mxu0 0
    %1393 = vmatpush1.bf16.msra.mxu0 0
    %1394 = vmatprep.subr.bf16.mxu0 0
    %1395 = vmatpush1.bf16.msra.mxu0 0
    %1396 = vmatprep.subr.bf16.mxu0 0
    %1397 = vmatpush1.bf16.msra.mxu0 0
    %1398 = vmatprep.mubr.bf16.mxu0 0
    %1399 = vmatmul.mubr.bf16.gmra.mrb[0].mxu0 %v1364
    %v1400 = vpop.f32.mrb[0].mxu0
    %v1401 = vadd.f32 %v1350, %v1400
    %v1402 = vpop.f32.mrb[0].mxu0
    %v1403 = vpop.f32.mrb[0].mxu0
    %v1404 = vadd.f32 %v1350, %v1403
    %v1405 = vpop.f32.mrb[0].mxu0
    %1406 = vdwg.mxu0
    %v1407 = vadd.f32 %v892, %v1401
    %v1408 = vadd.f32 %v893, %v1404
    %v1409 = vsel %vm37, %v1407, 0.0
    %1410 = vadd.xlane.f32.xlu0 %v1409
    %v1411 = vpop.xlane.xlu0 %1410
    %v1412 = vsel %vm37, %v1408, 0.0
    %1413 = vadd.xlane.f32.xlu0 %v1412
    %v1414 = vpop.xlane.xlu0 %1413
    %v1415 = vmul.f32 %v1411, 0.03125
    %v1416 = vmul.f32 %v1414, 0.03125
    %v1417 = vmul.f32 %v1407, %v1407
    %v1418 = vmul.f32 %v1408, %v1408
    %v1419 = vsel %vm37, %v1417, 0.0
    %1420 = vadd.xlane.f32.xlu0 %v1419
    %v1421 = vpop.xlane.xlu0 %1420
    %v1422 = vsel %vm37, %v1418, 0.0
    %1423 = vadd.xlane.f32.xlu0 %v1422
    %v1424 = vpop.xlane.xlu0 %1423
    %v1425 = vmul.f32 %v1421, 0.03125
    %v1426 = vmul.f32 %v1424, 0.03125
    %v1427 = vmul.f32 %v1415, %v1415
    %v1428 = vmul.f32 %v1416, %v1416
    %v1429 = vsub.f32 %v1425, %v1427
    %v1430 = vsub.f32 %v1426, %v1428
    %v1431 = vmax.f32 %v1429, 0.0
    %v1432 = vmax.f32 %v1430, 0.0
    %v1433 = vsub.f32 %v1407, %v1415
    %v1434 = vsub.f32 %v1408, %v1416
    %v1435 = vadd.f32 %v1431, 1e-12
    %v1436 = vadd.f32 %v1432, 1e-12
    %v1437 = vrsqrt.pop %v1435
    %v1438 = vrsqrt.pop %v1436
    %v1439 = vmul.f32 %v1433, %v1437
    %v1440 = vmul.f32 %v1434, %v1438
    %v1441 = vlaneseq
    %v1442 = vshrl.u32 %v1441, 7
    %v1443 = vsub.s32 4, %v1442
    %v1444 = vrot.slane %v895, %v1443
    %v1445 = vmul.f32 %v1439, %v1444
    %v1446 = vmul.f32 %v1440, %v1444
    %v1447 = vlaneseq
    %v1448 = vshrl.u32 %v1447, 7
    %v1449 = vsub.s32 5, %v1448
    %v1450 = vrot.slane %v895, %v1449
    %v1451 = vadd.f32 %v1445, %v1450
    %v1452 = vadd.f32 %v1446, %v1450
    %v1453 = vpack.c.bf16 %v1452, %v1451
    %s1454 = scalar_lea.vmem %s5, 16
    %v1455 = vld [vmem:[%s1454] sm:$0xf]
    %v1456 = vld [vmem:[%s1454 + $0x4] sm:$0xf]
    %v1457 = vld [vmem:[%s1454 + $0x8] sm:$0xf]
    %v1458 = vld [vmem:[%s1454 + $0xc] sm:$0xf]
    %s1459 = scalar_lea.vmem %s6, 1
    %v1460 = vld [vmem:[%s1459] sm:$0x1]
    %v1462 = vlaneseq
    %v1463 = vshrl.u32 %v1462, 7
    %v1464 = vsub.s32 0, %v1463
    %v1465 = vrot.slane %v1460, %v1464
    %v1471 = vunpack.c.l.b16 %v1455
    %v1472 = vunpack.c.l.b16 %v1456
    %v1473 = vunpack.c.l.b16 %v1457
    %v1474 = vunpack.c.l.b16 %v1458
    %v1475 = vpack.c.b16 %v1472, %v1471
    %v1476 = vpack.c.b16 %v1474, %v1473
    %v1480 = vsel %vm37, %v1453, 0
    %1482 = vmatprep.subr.bf16.mxu0 0
    %1483 = vmatpush1.bf16.msra.mxu0 %v1475
    %1484 = vmatprep.subr.bf16.mxu0 0
    %1485 = vmatpush1.bf16.msra.mxu0 %v1476
    %1486 = vmatprep.subr.bf16.mxu0 0
    %1487 = vmatpush1.bf16.msra.mxu0 0
    %1488 = vmatprep.subr.bf16.mxu0 0
    %1489 = vmatpush1.bf16.msra.mxu0 0
    %1490 = vmatprep.subr.bf16.mxu0 0
    %1491 = vmatpush1.bf16.msra.mxu0 0
    %1492 = vmatprep.subr.bf16.mxu0 0
    %1493 = vmatpush1.bf16.msra.mxu0 0
    %1494 = vmatprep.subr.bf16.mxu0 0
    %1495 = vmatpush1.bf16.msra.mxu0 0
    %1496 = vmatprep.subr.bf16.mxu0 0
    %1497 = vmatpush1.bf16.msra.mxu0 0
    %1498 = vmatprep.subr.bf16.mxu0 0
    %1499 = vmatpush1.bf16.msra.mxu0 0
    %1500 = vmatprep.subr.bf16.mxu0 0
    %1501 = vmatpush1.bf16.msra.mxu0 0
    %1502 = vmatprep.subr.bf16.mxu0 0
    %1503 = vmatpush1.bf16.msra.mxu0 0
    %1504 = vmatprep.subr.bf16.mxu0 0
    %1505 = vmatpush1.bf16.msra.mxu0 0
    %1506 = vmatprep.subr.bf16.mxu0 0
    %1507 = vmatpush1.bf16.msra.mxu0 0
    %1508 = vmatprep.subr.bf16.mxu0 0
    %1509 = vmatpush1.bf16.msra.mxu0 0
    %1510 = vmatprep.subr.bf16.mxu0 0
    %1511 = vmatpush1.bf16.msra.mxu0 0
    %1512 = vmatprep.subr.bf16.mxu0 0
    %1513 = vmatpush1.bf16.msra.mxu0 0
    %1514 = vmatprep.mubr.bf16.mxu0 0
    %1515 = vmatmul.mubr.bf16.gmra.mrb[0].mxu0 %v1480
    %v1516 = vpop.f32.mrb[0].mxu0
    %v1517 = vadd.f32 %v1465, %v1516
    %v1518 = vpop.f32.mrb[0].mxu0
    %v1519 = vpop.f32.mrb[0].mxu0
    %v1520 = vadd.f32 %v1465, %v1519
    %v1521 = vpop.f32.mrb[0].mxu0
    %1522 = vdwg.mxu0
    %v1523 = vmul.f32 %v1517, 0.5
    %v1524 = vmul.f32 %v1520, 0.5
    %v1525 = vmul.f32 %v1517, 0.044715
    %v1526 = vmul.f32 %v1520, 0.044715
    %v1527 = vmul.f32 %v1525, %v1517
    %v1528 = vmul.f32 %v1526, %v1520
    %v1529 = vmul.f32 %v1527, %v1517
    %v1530 = vmul.f32 %v1528, %v1520
    %v1531 = vadd.f32 %v1517, %v1529
    %v1532 = vadd.f32 %v1520, %v1530
    %v1533 = vmul.f32 %v1531, 0.7978846
    %v1534 = vmul.f32 %v1532, 0.7978846
    %v1535 = vtanh.pop %v1533
    %v1536 = vtanh.pop %v1534
    %v1537 = vadd.f32 %v1535, 1.0
    %v1538 = vadd.f32 %v1536, 1.0
    %v1539 = vmul.f32 %v1523, %v1537
    %v1540 = vmul.f32 %v1524, %v1538
    %v1541 = vpack.c.bf16 %v1540, %v1539
    %s1542 = scalar_lea.vmem %s7, 64
    %v1543 = vld [vmem:[%s1542] sm:$0xf]
    %v1544 = vld [vmem:[%s1542 + $0x4] sm:$0xf]
    %v1545 = vld [vmem:[%s1542 + $0x8] sm:$0xf]
    %v1546 = vld [vmem:[%s1542 + $0xc] sm:$0xf]
    %v1547 = vld [vmem:[%s1542 + $0x10] sm:$0xf]
    %v1548 = vld [vmem:[%s1542 + $0x14] sm:$0xf]
    %v1549 = vld [vmem:[%s1542 + $0x18] sm:$0xf]
    %v1550 = vld [vmem:[%s1542 + $0x1c] sm:$0xf]
    %v1551 = vld [vmem:[%s1542 + $0x20] sm:$0xf]
    %v1552 = vld [vmem:[%s1542 + $0x24] sm:$0xf]
    %v1553 = vld [vmem:[%s1542 + $0x28] sm:$0xf]
    %v1554 = vld [vmem:[%s1542 + $0x2c] sm:$0xf]
    %v1555 = vld [vmem:[%s1542 + $0x30] sm:$0xf]
    %v1556 = vld [vmem:[%s1542 + $0x34] sm:$0xf]
    %v1557 = vld [vmem:[%s1542 + $0x38] sm:$0xf]
    %v1558 = vld [vmem:[%s1542 + $0x3c] sm:$0xf]
    %v1559 = vlaneseq
    %v1560 = vshrl.u32 %v1559, 7
    %v1561 = vsub.s32 6, %v1560
    %v1562 = vrot.slane %v895, %v1561
    %v1579 = vunpack.c.l.b16 %v1543
    %v1580 = vunpack.c.l.b16 %v1544
    %v1581 = vunpack.c.l.b16 %v1545
    %v1582 = vunpack.c.l.b16 %v1546
    %v1583 = vunpack.c.l.b16 %v1547
    %v1584 = vunpack.c.l.b16 %v1548
    %v1585 = vunpack.c.l.b16 %v1549
    %v1586 = vunpack.c.l.b16 %v1550
    %v1587 = vunpack.c.l.b16 %v1551
    %v1588 = vunpack.c.l.b16 %v1552
    %v1589 = vunpack.c.l.b16 %v1553
    %v1590 = vunpack.c.l.b16 %v1554
    %v1591 = vunpack.c.l.b16 %v1555
    %v1592 = vunpack.c.l.b16 %v1556
    %v1593 = vunpack.c.l.b16 %v1557
    %v1594 = vunpack.c.l.b16 %v1558
    %v1595 = vpack.c.b16 %v1580, %v1579
    %v1596 = vpack.c.b16 %v1582, %v1581
    %v1597 = vpack.c.b16 %v1584, %v1583
    %v1598 = vpack.c.b16 %v1586, %v1585
    %v1599 = vpack.c.b16 %v1588, %v1587
    %v1600 = vpack.c.b16 %v1590, %v1589
    %v1601 = vpack.c.b16 %v1592, %v1591
    %v1602 = vpack.c.b16 %v1594, %v1593
    %1611 = vmatprep.subr.bf16.mxu0 0
    %1612 = vmatpush1.bf16.msra.mxu0 %v1595
    %1613 = vmatprep.subr.bf16.mxu0 0
    %1614 = vmatpush1.bf16.msra.mxu0 %v1596
    %1615 = vmatprep.subr.bf16.mxu0 0
    %1616 = vmatpush1.bf16.msra.mxu0 %v1597
    %1617 = vmatprep.subr.bf16.mxu0 0
    %1618 = vmatpush1.bf16.msra.mxu0 %v1598
    %1619 = vmatprep.subr.bf16.mxu0 0
    %1620 = vmatpush1.bf16.msra.mxu0 %v1599
    %1621 = vmatprep.subr.bf16.mxu0 0
    %1622 = vmatpush1.bf16.msra.mxu0 %v1600
    %1623 = vmatprep.subr.bf16.mxu0 0
    %1624 = vmatpush1.bf16.msra.mxu0 %v1601
    %1625 = vmatprep.subr.bf16.mxu0 0
    %1626 = vmatpush1.bf16.msra.mxu0 %v1602
    %1627 = vmatprep.subr.bf16.mxu0 0
    %1628 = vmatpush1.bf16.msra.mxu0 0
    %1629 = vmatprep.subr.bf16.mxu0 0
    %1630 = vmatpush1.bf16.msra.mxu0 0
    %1631 = vmatprep.subr.bf16.mxu0 0
    %1632 = vmatpush1.bf16.msra.mxu0 0
    %1633 = vmatprep.subr.bf16.mxu0 0
    %1634 = vmatpush1.bf16.msra.mxu0 0
    %1635 = vmatprep.subr.bf16.mxu0 0
    %1636 = vmatpush1.bf16.msra.mxu0 0
    %1637 = vmatprep.subr.bf16.mxu0 0
    %1638 = vmatpush1.bf16.msra.mxu0 0
    %1639 = vmatprep.subr.bf16.mxu0 0
    %1640 = vmatpush1.bf16.msra.mxu0 0
    %1641 = vmatprep.subr.bf16.mxu0 0
    %1642 = vmatpush1.bf16.msra.mxu0 0
    %1643 = vmatprep.mubr.bf16.mxu0 0
    %1644 = vmatmul.mubr.bf16.gmra.mrb[0].mxu0 %v1541
    %v1645 = vpop.f32.mrb[0].mxu0
    %v1646 = vadd.f32 %v1562, %v1645
    %v1647 = vpop.f32.mrb[0].mxu0
    %v1648 = vpop.f32.mrb[0].mxu0
    %v1649 = vadd.f32 %v1562, %v1648
    %v1650 = vpop.f32.mrb[0].mxu0
    %1651 = vdwg.mxu0
    %v1652 = vadd.f32 %v1451, %v1646
    %v1653 = vadd.f32 %v1452, %v1649
    %v1654 = vsel %vm37, %v1652, 0.0
    %1655 = vadd.xlane.f32.xlu0 %v1654
    %v1656 = vpop.xlane.xlu0 %1655
    %v1657 = vsel %vm37, %v1653, 0.0
    %1658 = vadd.xlane.f32.xlu0 %v1657
    %v1659 = vpop.xlane.xlu0 %1658
    %v1660 = vmul.f32 %v1656, 0.03125
    %v1661 = vmul.f32 %v1659, 0.03125
    %v1662 = vmul.f32 %v1652, %v1652
    %v1663 = vmul.f32 %v1653, %v1653
    %v1664 = vsel %vm37, %v1662, 0.0
    %1665 = vadd.xlane.f32.xlu0 %v1664
    %v1666 = vpop.xlane.xlu0 %1665
    %v1667 = vsel %vm37, %v1663, 0.0
    %1668 = vadd.xlane.f32.xlu0 %v1667
    %v1669 = vpop.xlane.xlu0 %1668
    %v1670 = vmul.f32 %v1666, 0.03125
    %v1671 = vmul.f32 %v1669, 0.03125
    %v1672 = vmul.f32 %v1660, %v1660
    %v1673 = vmul.f32 %v1661, %v1661
    %v1674 = vsub.f32 %v1670, %v1672
    %v1675 = vsub.f32 %v1671, %v1673
    %v1676 = vmax.f32 %v1674, 0.0
    %v1677 = vmax.f32 %v1675, 0.0
    %v1678 = vsub.f32 %v1652, %v1660
    %v1679 = vsub.f32 %v1653, %v1661
    %v1680 = vadd.f32 %v1676, 1e-12
    %v1681 = vadd.f32 %v1677, 1e-12
    %v1682 = vrsqrt.pop %v1680
    %v1683 = vrsqrt.pop %v1681
    %v1684 = vmul.f32 %v1678, %v1682
    %v1685 = vmul.f32 %v1679, %v1683
    %v1686 = vlaneseq
    %v1687 = vshrl.u32 %v1686, 7
    %v1688 = vsub.s32 7, %v1687
    %v1689 = vrot.slane %v895, %v1688
    %v1690 = vmul.f32 %v1684, %v1689
    %v1691 = vmul.f32 %v1685, %v1689
    %v1692 = vlaneseq
    %v1693 = vshrl.u32 %v1692, 7
    %v1694 = vsub.s32 0, %v1693
    %v1695 = vrot.slane %v896, %v1694
    %v1696 = vadd.f32 %v1690, %v1695
    %v1697 = vadd.f32 %v1691, %v1695
    %1698 = vst.msk [vmem:[#allocation2] sm:$0xff] %vm37, %v1696
    %1699 = vst.msk [vmem:[#allocation2 + $0x8] sm:$0xff] %vm37, %v1697
    // Predicated region
    $region38: #{transformer_net_forward.1} parent=1 // pred_check
      _
    $region39: #{transformer_net_forward.1} parent=1 // pred_check_branch
      %1701 = sbr.rel (0) target = $region41
    $region40: #{transformer_net_forward.1} parent=1 // pred_region
      %s1703 = ssub.s32 256, 256
      %1704 = vsyncadd [#allocation3], %s1703
      %s1705 = sshll.u32 [#allocation2], 4
      %s1706 = int_to_ptr.vmem [resolvable:$true] %s1705
      %1711 = dma.vmem_to_hbm [thread:$0]  %s1706, 256, %s9, [#allocation3], 128, 128, 8
    $region41: #{transformer_net_forward.1} parent=1 // pred_fallthru
      _
    // Predicated region
    $region42: #{transformer_net_forward.1} parent=1 // pred_check
      _
    $region43: #{transformer_net_forward.1} parent=1 // pred_check_branch
      %1713 = sbr.rel (0) target = $region45
    $region44: #{transformer_net_forward.1} parent=1 // pred_region
      %1714 = dma.done [#allocation3], 256
    $region45: #{transformer_net_forward.1} parent=1 // pred_fallthru
      _
    %1715 = vsyncpa [#allocation3], 1

</llo_original>
